<compile_context>
chip_gen: v7x
topology: tpu7x:2x2x1
jax: 0.10.0
libtpu: 0.0.40
codegen_flags: <defaults>
</compile_context>

<pallas_src>
import math
import functools

import jax
import jax.numpy as jnp
from jax.experimental import pallas as pl
from jax.experimental.pallas import tpu as pltpu


def _mha_kernel(*refs, num_heads, atten_dim, output_dim, has_mask):
    if has_mask:
        (cur_ref, ctx_ref, mask_ref, wq_ref, bq_ref, wk_ref, bk_ref,
         wv_ref, bv_ref, woT_ref, bo_ref, out_ref, k_scr, v_scr) = refs
    else:
        (cur_ref, ctx_ref, wq_ref, bq_ref, wk_ref, bk_ref,
         wv_ref, bv_ref, woT_ref, bo_ref, out_ref, k_scr, v_scr) = refs
        mask_ref = None

    H, Da, Do = num_heads, atten_dim, output_dim
    qi = pl.program_id(1)

    # ---- K/V projection: once per batch (inner qi axis is "arbitrary"), kept
    # in persistent bf16 VMEM scratch and reused by every query tile. Two wide
    # matmuls from the same resident ctx tile -> no unaligned K|V lane split.
    @pl.when(qi == 0)
    def _():
        ctx = ctx_ref[0]                                             # [Lk, Din] bf16
        k = jnp.dot(ctx, wk_ref[...],
                    preferred_element_type=jnp.float32) + bk_ref[...]   # [Lk, H*Da]
        v = jnp.dot(ctx, wv_ref[...],
                    preferred_element_type=jnp.float32) + bv_ref[...]   # [Lk, H*Do]
        k_scr[...] = k.astype(jnp.bfloat16)
        v_scr[...] = v.astype(jnp.bfloat16)

    # ---- Q projection for this query tile (scale already folded into Wq/bq).
    cur = cur_ref[0]                                                 # [TQ, Din] bf16
    q = jnp.dot(cur, wq_ref[...],
                preferred_element_type=jnp.float32) + bq_ref[...]    # [TQ, H*Da]
    q_b = q.astype(jnp.bfloat16)
    TQ = q_b.shape[0]

    k_b = k_scr[...]                                                 # [Lk, H*Da] bf16
    v_b = v_scr[...]                                                 # [Lk, H*Do] bf16
    woT = woT_ref[...]                                               # [Do, H*Do] bf16

    # Mask -> additive bias, computed once per tile (outside the head loop).
    if has_mask:
        bias = jnp.where(mask_ref[0] > 0, 0.0, -1e30).astype(jnp.float32)  # [TQ, Lk]

    # Contract on the trailing (feature) axis of both operands.
    dn = (((1,), (1,)), ((), ()))

    # Transposed (lane-dense) output accumulator: [Do, TQ], TQ on the lane axis.
    out_t = jnp.zeros((Do, TQ), jnp.float32)

    for h in range(H):                 # static, unrolled; Da/Do are tiny
        qh = q_b[:, h * Da:(h + 1) * Da]                             # [TQ, Da]
        kh = k_b[:, h * Da:(h + 1) * Da]                             # [Lk, Da]
        vh = v_b[:, h * Do:(h + 1) * Do]                             # [Lk, Do]

        s = jax.lax.dot_general(qh, kh, dimension_numbers=dn,
                                preferred_element_type=jnp.float32)  # [TQ, Lk]
        if has_mask:
            # Fully-masked rows softmax to uniform attention, matching the
            # reference -1e30 masked_fill semantics.
            s = s + bias

        m = jnp.max(s, axis=-1, keepdims=True)
        p = jnp.exp(s - m)
        attn = p * pl.reciprocal(jnp.sum(p, axis=-1, keepdims=True), approx=True)

        yh = jnp.dot(attn.astype(jnp.bfloat16), vh,
                     preferred_element_type=jnp.float32)             # [TQ, Do]

        # Output projection for this head, accumulated transposed so the final
        # store is lane-dense: result[d, t] = sum_j wo[h*Do + j, d] * yh[t, j].
        out_t = out_t + jax.lax.dot_general(
            woT[:, h * Do:(h + 1) * Do], yh.astype(jnp.bfloat16),
            dimension_numbers=dn, preferred_element_type=jnp.float32)  # [Do, TQ]

    out_ref[0, 0] = (out_t + bo_ref[...]).astype(out_ref.dtype)      # [Do, TQ]


def mha_attention(current_tokens, context_tokens, params, attention_mask=None):
    """current_tokens: [B, Lq, Din], context_tokens: [B, Lk, Din] -> [B, Lq, Do]."""
    wq, bq, wk, bk, wv, bv, wo, bo = params
    B, Lq, Din = current_tokens.shape
    _, Lk, _ = context_tokens.shape
    H, _, Da = wq.shape
    Do = wv.shape[2]
    scale = 1.0 / math.sqrt(Da)

    # ---- head-fused weight packing (wrapper-side, cheap, cached under jit) ----
    wq_p = (wq.transpose(1, 0, 2).reshape(Din, H * Da) * scale).astype(jnp.bfloat16)
    bq_p = (bq.reshape(1, H * Da) * scale).astype(jnp.float32)
    wk_p = wk.transpose(1, 0, 2).reshape(Din, H * Da).astype(jnp.bfloat16)
    bk_p = bk.reshape(1, H * Da).astype(jnp.float32)
    wv_p = wv.transpose(1, 0, 2).reshape(Din, H * Do).astype(jnp.bfloat16)
    bv_p = bv.reshape(1, H * Do).astype(jnp.float32)
    woT = wo.T.astype(jnp.bfloat16)                      # [Do, H*Do] (pre-transposed)
    bo_c = bo.reshape(Do, 1).astype(jnp.float32)         # column bias for [Do, TQ]

    cur_b = current_tokens.astype(jnp.bfloat16)
    ctx_b = context_tokens.astype(jnp.bfloat16)

    # ---- query tiling: no whole-Lq fallback; pad Lq to a clean tile size ----
    if Lq >= 128:
        TQ = 128
    else:
        TQ = max(8, -(-Lq // 8) * 8)                     # round up to sublane (8)
    n_q = -(-Lq // TQ)
    Lq_pad = n_q * TQ
    if Lq_pad != Lq:
        cur_b = jnp.pad(cur_b, ((0, 0), (0, Lq_pad - Lq), (0, 0)))

    has_mask = attention_mask is not None

    args = [cur_b, ctx_b]
    in_specs = [
        pl.BlockSpec((1, TQ, Din), lambda b, qi: (b, qi, 0)),   # current tile
        pl.BlockSpec((1, Lk, Din), lambda b, qi: (b, 0, 0)),    # full context (per b)
    ]
    if has_mask:
        m = attention_mask
        if m.ndim == 2:
            m = m[None]
        Bm = m.shape[0]                                   # 1 or B; NOT broadcast to B
        mask_i8 = (m > 0).astype(jnp.int8)
        if Lq_pad != Lq:
            mask_i8 = jnp.pad(mask_i8, ((0, 0), (0, Lq_pad - Lq), (0, 0)))
        args.append(mask_i8)
        if Bm == 1:
            in_specs.append(pl.BlockSpec((1, TQ, Lk), lambda b, qi: (0, qi, 0)))
        else:
            in_specs.append(pl.BlockSpec((1, TQ, Lk), lambda b, qi: (b, qi, 0)))

    weights = (wq_p, bq_p, wk_p, bk_p, wv_p, bv_p, woT, bo_c)
    args += list(weights)
    in_specs += [pl.BlockSpec(w.shape, lambda b, qi: (0, 0)) for w in weights]

    kernel = functools.partial(_mha_kernel, num_heads=H, atten_dim=Da,
                               output_dim=Do, has_mask=has_mask)

    # ---- VMEM budget derived from actual block sizes, with headroom ----
    out_itemsize = current_tokens.dtype.itemsize
    weight_bytes = sum(int(w.size) * w.dtype.itemsize for w in weights)
    block_bytes = (TQ * Din * 2 + Lk * Din * 2            # cur + ctx tiles (bf16)
                   + (TQ * Lk if has_mask else 0)          # int8 mask tile
                   + Do * TQ * out_itemsize                # output tile
                   + weight_bytes)
    scratch_bytes = Lk * H * (Da + Do) * 2                 # bf16 K/V scratch
    work_bytes = 4 * (3 * TQ * Lk + TQ * H * (Da + Do) + Lk * H * (Da + Do))
    needed = 2 * block_bytes + scratch_bytes + work_bytes  # 2x: double buffering
    try:
        vmem_cap = int(pltpu.get_tpu_info().vmem_capacity_bytes)
    except Exception:
        vmem_cap = 64 * 1024 * 1024                        # conservative (v7x per-TC)
    vmem_limit = int(min(max(2 * needed, 32 * 1024 * 1024),
                         max(vmem_cap - 16 * 1024 * 1024, 32 * 1024 * 1024)))

    out4 = pl.pallas_call(
        kernel,
        # Lane-dense output: [Do, TQ] per tile (TQ on the lane axis); transposed
        # and reshaped back to (B, Lq, Do) outside the kernel.
        out_shape=jax.ShapeDtypeStruct((B, n_q, Do, TQ), current_tokens.dtype),
        grid_spec=pltpu.PrefetchScalarGridSpec(
            num_scalar_prefetch=0,
            grid=(B, n_q),
            in_specs=in_specs,
            out_specs=pl.BlockSpec((1, 1, Do, TQ), lambda b, qi: (b, qi, 0, 0)),
            scratch_shapes=[pltpu.VMEM((Lk, H * Da), jnp.bfloat16),   # K (per batch)
                            pltpu.VMEM((Lk, H * Do), jnp.bfloat16)],  # V (per batch)
        ),
        compiler_params=pltpu.CompilerParams(
            # qi must be sequential ("arbitrary"): the K/V scratch computed at
            # qi == 0 is reused by all query tiles of the same batch.
            dimension_semantics=("parallel", "arbitrary"),
            vmem_limit_bytes=vmem_limit),
    )(*args)

    out = jnp.swapaxes(out4, 2, 3).reshape(B, Lq_pad, Do)
    return out[:, :Lq] if Lq_pad != Lq else out


def init_params(key, num_heads, input_dim, atten_dim, output_dim):
    """Deterministic init mirroring nn.Linear's uniform(-1/sqrt(fan_in), ...)."""
    ks = jax.random.split(key, 8)

    def lin(k, fan_in, shape):
        bound = 1.0 / math.sqrt(fan_in)
        return jax.random.uniform(k, shape, jnp.float32, -bound, bound)

    wq = lin(ks[0], input_dim, (num_heads, input_dim, atten_dim))
    bq = lin(ks[1], input_dim, (num_heads, 1, atten_dim))
    wk = lin(ks[2], input_dim, (num_heads, input_dim, atten_dim))
    bk = lin(ks[3], input_dim, (num_heads, 1, atten_dim))
    wv = lin(ks[4], input_dim, (num_heads, input_dim, output_dim))
    bv = lin(ks[5], input_dim, (num_heads, 1, output_dim))
    wo = lin(ks[6], num_heads * output_dim, (num_heads * output_dim, output_dim))
    bo = lin(ks[7], num_heads * output_dim, (1, output_dim))
    return (wq, bq, wk, bk, wv, bv, wo, bo)


def mha_reference(current_tokens, context_tokens, params, attention_mask=None):
    """Pure-JAX f32 reference of the PyTorch forward, for correctness check."""
    wq, bq, wk, bk, wv, bv, wo, bo = params
    H, _, Da = wq.shape
    B, Lq, _ = current_tokens.shape
    Lk = context_tokens.shape[1]
    if attention_mask is None:
        attention_mask = jnp.ones((B, Lq, Lk), jnp.float32)
    else:
        attention_mask = jnp.broadcast_to(attention_mask.astype(jnp.float32),
                                          (B, Lq, Lk))
    ys = []
    for h in range(H):
        q = current_tokens @ wq[h] + bq[h]
        k = context_tokens @ wk[h] + bk[h]
        v = context_tokens @ wv[h] + bv[h]
        s = (q @ jnp.swapaxes(k, -1, -2)) / math.sqrt(Da)
        s = jnp.where(attention_mask > 0, s, -1e30)
        a = jax.nn.softmax(s, axis=-1)
        ys.append(a @ v)
    y = jnp.concatenate(ys, axis=2)
    return y @ wo + bo


if __name__ == "__main__":
    num_heads, input_dim, atten_dim, output_dim = 4, 32, 16, 16
    B, Lq, Lk = 2, 8, 8

    key = jax.random.PRNGKey(0)
    k_par, k_cur, k_ctx = jax.random.split(key, 3)

    params = init_params(k_par, num_heads, input_dim, atten_dim, output_dim)
    current_tokens = jax.random.normal(k_cur, (B, Lq, input_dim), jnp.float32)
    context_tokens = jax.random.normal(k_ctx, (B, Lk, input_dim), jnp.float32)

    # bf16 matmuls with f32 accumulation -> compare against f32 reference with
    # mixed-precision tolerances.
    tol = dict(atol=5e-2, rtol=5e-2)

    # No-mask path (mask DMA eliminated entirely).
    out = mha_attention(current_tokens, context_tokens, params, attention_mask=None)
    out = jax.block_until_ready(out)
    ref = mha_reference(current_tokens, context_tokens, params, attention_mask=None)
    assert out.shape == (B, Lq, output_dim)
    assert jnp.allclose(out, ref, **tol), "mismatch vs reference (no mask)"

    # Masked path (int8 mask with size-1 batch dim, causal).
    causal = jnp.tril(jnp.ones((Lq, Lk), jnp.float32))[None]   # [1, Lq, Lk]
    out_m = mha_attention(current_tokens, context_tokens, params,
                          attention_mask=causal)
    out_m = jax.block_until_ready(out_m)
    ref_m = mha_reference(current_tokens, context_tokens, params,
                          attention_mask=causal)
    assert jnp.allclose(out_m, ref_m, **tol), "mismatch vs reference (masked)"

    print("KERNEL_OK")
</pallas_src>

<mosaic_0001>
module attributes {stable_mosaic.version = 11 : i64} {
  func.func @_mha_kernel(%arg0: i32, %arg1: i32, %arg2: memref<1x8x32xbf16, #tpu.memory_space<vmem>>, %arg3: memref<1x8x32xbf16, #tpu.memory_space<vmem>>, %arg4: memref<32x64xbf16, #tpu.memory_space<vmem>>, %arg5: memref<1x64xf32, #tpu.memory_space<vmem>>, %arg6: memref<32x64xbf16, #tpu.memory_space<vmem>>, %arg7: memref<1x64xf32, #tpu.memory_space<vmem>>, %arg8: memref<32x64xbf16, #tpu.memory_space<vmem>>, %arg9: memref<1x64xf32, #tpu.memory_space<vmem>>, %arg10: memref<16x64xbf16, #tpu.memory_space<vmem>>, %arg11: memref<16x1xf32, #tpu.memory_space<vmem>>, %arg12: memref<1x1x16x8xf32, #tpu.memory_space<vmem>>, %arg13: memref<8x64xbf16, #tpu.memory_space<vmem>>, %arg14: memref<8x64xbf16, #tpu.memory_space<vmem>>) attributes {dimension_semantics = [#tpu.dimension_semantics<parallel>, #tpu.dimension_semantics<arbitrary>], iteration_bounds = array<i64: 2, 1>, scalar_prefetch = 0 : i64, scratch_operands = 2 : i64, tpu.core_type = #tpu.core_type<tc>, window_params = [{transform_indices = @transform_0, window_bounds = array<i64: 1, 8, 32>}, {transform_indices = @transform_1, window_bounds = array<i64: 1, 8, 32>}, {pipeline_mode = #tpu.pipeline_mode<synchronous>, transform_indices = @transform_2, window_bounds = array<i64: 32, 64>}, {pipeline_mode = #tpu.pipeline_mode<synchronous>, transform_indices = @transform_3, window_bounds = array<i64: 1, 64>}, {pipeline_mode = #tpu.pipeline_mode<synchronous>, transform_indices = @transform_4, window_bounds = array<i64: 32, 64>}, {pipeline_mode = #tpu.pipeline_mode<synchronous>, transform_indices = @transform_5, window_bounds = array<i64: 1, 64>}, {pipeline_mode = #tpu.pipeline_mode<synchronous>, transform_indices = @transform_6, window_bounds = array<i64: 32, 64>}, {pipeline_mode = #tpu.pipeline_mode<synchronous>, transform_indices = @transform_7, window_bounds = array<i64: 1, 64>}, {pipeline_mode = #tpu.pipeline_mode<synchronous>, transform_indices = @transform_8, window_bounds = array<i64: 16, 64>}, {pipeline_mode = #tpu.pipeline_mode<synchronous>, transform_indices = @transform_9, window_bounds = array<i64: 16, 1>}, {transform_indices = @transform_10, window_bounds = array<i64: 1, 1, 16, 8>}]} {
    %c0_i32 = arith.constant 0 : i32
    %0 = arith.cmpi eq, %arg1, %c0_i32 : i32
    %1 = arith.extui %0 : i1 to i32
    %c0_i32_0 = arith.constant 0 : i32
    %2 = arith.cmpi ne, %1, %c0_i32_0 : i32
    scf.if %2 {
      %c0_40 = arith.constant 0 : index
      %c0_41 = arith.constant 0 : index
      %c0_42 = arith.constant 0 : index
      %101 = vector.load %arg3[%c0_40, %c0_41, %c0_42] : memref<1x8x32xbf16, #tpu.memory_space<vmem>>, vector<1x8x32xbf16>
      %102 = vector.shape_cast %101 : vector<1x8x32xbf16> to vector<8x32xbf16>
      %c0_43 = arith.constant 0 : index
      %c0_44 = arith.constant 0 : index
      %103 = vector.load %arg6[%c0_43, %c0_44] : memref<32x64xbf16, #tpu.memory_space<vmem>>, vector<32x64xbf16>
      %cst_45 = arith.constant dense<0.000000e+00> : vector<8x64xf32>
      %104 = tpu.matmul %102, %103, %cst_45 {dimension_numbers = #tpu.dot_dimension_numbers<[1], [0], [0], [1], [0, 0, 1, 1], [], []>} : vector<8x32xbf16>, vector<32x64xbf16>, vector<8x64xf32> -> vector<8x64xf32>
      %c0_46 = arith.constant 0 : index
      %c0_47 = arith.constant 0 : index
      %105 = vector.load %arg7[%c0_46, %c0_47] : memref<1x64xf32, #tpu.memory_space<vmem>>, vector<1x64xf32>
      %106 = vector.broadcast %105 : vector<1x64xf32> to vector<8x64xf32>
      %107 = arith.addf %104, %106 : vector<8x64xf32>
      %c0_48 = arith.constant 0 : index
      %c0_49 = arith.constant 0 : index
      %108 = vector.load %arg8[%c0_48, %c0_49] : memref<32x64xbf16, #tpu.memory_space<vmem>>, vector<32x64xbf16>
      %cst_50 = arith.constant dense<0.000000e+00> : vector<8x64xf32>
      %109 = tpu.matmul %102, %108, %cst_50 {dimension_numbers = #tpu.dot_dimension_numbers<[1], [0], [0], [1], [0, 0, 1, 1], [], []>} : vector<8x32xbf16>, vector<32x64xbf16>, vector<8x64xf32> -> vector<8x64xf32>
      %c0_51 = arith.constant 0 : index
      %c0_52 = arith.constant 0 : index
      %110 = vector.load %arg9[%c0_51, %c0_52] : memref<1x64xf32, #tpu.memory_space<vmem>>, vector<1x64xf32>
      %111 = vector.broadcast %110 : vector<1x64xf32> to vector<8x64xf32>
      %112 = arith.addf %109, %111 : vector<8x64xf32>
      %113 = arith.truncf %107 : vector<8x64xf32> to vector<8x64xbf16>
      %c0_53 = arith.constant 0 : index
      %c0_54 = arith.constant 0 : index
      %114 = vector.load %arg13[%c0_53, %c0_54] : memref<8x64xbf16, #tpu.memory_space<vmem>>, vector<8x64xbf16>
      tpu.vector_store %arg13[%c0_53, %c0_54], %113 {strides = array<i32>} : memref<8x64xbf16, #tpu.memory_space<vmem>>, vector<8x64xbf16>,
      %115 = arith.truncf %112 : vector<8x64xf32> to vector<8x64xbf16>
      %c0_55 = arith.constant 0 : index
      %c0_56 = arith.constant 0 : index
      %116 = vector.load %arg14[%c0_55, %c0_56] : memref<8x64xbf16, #tpu.memory_space<vmem>>, vector<8x64xbf16>
      tpu.vector_store %arg14[%c0_55, %c0_56], %115 {strides = array<i32>} : memref<8x64xbf16, #tpu.memory_space<vmem>>, vector<8x64xbf16>,
    } else {
    }
    %c0 = arith.constant 0 : index
    %c0_1 = arith.constant 0 : index
    %c0_2 = arith.constant 0 : index
    %3 = vector.load %arg2[%c0, %c0_1, %c0_2] : memref<1x8x32xbf16, #tpu.memory_space<vmem>>, vector<1x8x32xbf16>
    %4 = vector.shape_cast %3 : vector<1x8x32xbf16> to vector<8x32xbf16>
    %c0_3 = arith.constant 0 : index
    %c0_4 = arith.constant 0 : index
    %5 = vector.load %arg4[%c0_3, %c0_4] : memref<32x64xbf16, #tpu.memory_space<vmem>>, vector<32x64xbf16>
    %cst = arith.constant dense<0.000000e+00> : vector<8x64xf32>
    %6 = tpu.matmul %4, %5, %cst {dimension_numbers = #tpu.dot_dimension_numbers<[1], [0], [0], [1], [0, 0, 1, 1], [], []>} : vector<8x32xbf16>, vector<32x64xbf16>, vector<8x64xf32> -> vector<8x64xf32>
    %c0_5 = arith.constant 0 : index
    %c0_6 = arith.constant 0 : index
    %7 = vector.load %arg5[%c0_5, %c0_6] : memref<1x64xf32, #tpu.memory_space<vmem>>, vector<1x64xf32>
    %8 = vector.broadcast %7 : vector<1x64xf32> to vector<8x64xf32>
    %9 = arith.addf %6, %8 : vector<8x64xf32>
    %10 = arith.truncf %9 : vector<8x64xf32> to vector<8x64xbf16>
    %c0_7 = arith.constant 0 : index
    %c0_8 = arith.constant 0 : index
    %11 = vector.load %arg13[%c0_7, %c0_8] : memref<8x64xbf16, #tpu.memory_space<vmem>>, vector<8x64xbf16>
    %c0_9 = arith.constant 0 : index
    %c0_10 = arith.constant 0 : index
    %12 = vector.load %arg14[%c0_9, %c0_10] : memref<8x64xbf16, #tpu.memory_space<vmem>>, vector<8x64xbf16>
    %c0_11 = arith.constant 0 : index
    %c0_12 = arith.constant 0 : index
    %13 = vector.load %arg10[%c0_11, %c0_12] : memref<16x64xbf16, #tpu.memory_space<vmem>>, vector<16x64xbf16>
    %cst_13 = arith.constant 0.000000e+00 : f32
    %14 = vector.broadcast %cst_13 : f32 to vector<16x8xf32>
    %15 = vector.extract_strided_slice %10 {offsets = [0, 0], sizes = [8, 16], strides = [1, 1]} : vector<8x64xbf16> to vector<8x16xbf16>
    %16 = vector.extract_strided_slice %11 {offsets = [0, 0], sizes = [8, 16], strides = [1, 1]} : vector<8x64xbf16> to vector<8x16xbf16>
    %17 = vector.extract_strided_slice %12 {offsets = [0, 0], sizes = [8, 16], strides = [1, 1]} : vector<8x64xbf16> to vector<8x16xbf16>
    %cst_14 = arith.constant dense<0.000000e+00> : vector<8x8xf32>
    %18 = tpu.matmul %15, %16, %cst_14 {dimension_numbers = #tpu.dot_dimension_numbers<[1], [1], [0], [0], [0, 0, 1, 0], [], []>} : vector<8x16xbf16>, vector<8x16xbf16>, vector<8x8xf32> -> vector<8x8xf32>
    %cst_15 = arith.constant dense<0xFF800000> : vector<8xf32>
    %19 = vector.multi_reduction <maximumf>, %18, %cst_15 [1] : vector<8x8xf32> to vector<8xf32>
    %20 = vector.shape_cast %19 : vector<8xf32> to vector<8x1xf32>
    %21 = vector.broadcast %20 : vector<8x1xf32> to vector<8x8xf32>
    %22 = arith.subf %18, %21 : vector<8x8xf32>
    %23 = math.exp %22 : vector<8x8xf32>
    %cst_16 = arith.constant dense<0.000000e+00> : vector<8xf32>
    %24 = vector.multi_reduction <add>, %23, %cst_16 [1] : vector<8x8xf32> to vector<8xf32>
    %25 = vector.shape_cast %24 : vector<8xf32> to vector<8x1xf32>
    %26 = tpu.reciprocal %25 {approx = true} : vector<8x1xf32> -> vector<8x1xf32>
    %27 = vector.broadcast %26 : vector<8x1xf32> to vector<8x8xf32>
    %28 = arith.mulf %23, %27 : vector<8x8xf32>
    %29 = arith.truncf %28 : vector<8x8xf32> to vector<8x8xbf16>
    %cst_17 = arith.constant dense<0.000000e+00> : vector<8x16xf32>
    %30 = tpu.matmul %29, %17, %cst_17 {dimension_numbers = #tpu.dot_dimension_numbers<[1], [0], [0], [1], [0, 0, 1, 1], [], []>} : vector<8x8xbf16>, vector<8x16xbf16>, vector<8x16xf32> -> vector<8x16xf32>
    %31 = vector.extract_strided_slice %13 {offsets = [0, 0], sizes = [16, 16], strides = [1, 1]} : vector<16x64xbf16> to vector<16x16xbf16>
    %32 = arith.truncf %30 : vector<8x16xf32> to vector<8x16xbf16>
    %cst_18 = arith.constant dense<0.000000e+00> : vector<16x8xf32>
    %33 = tpu.matmul %31, %32, %cst_18 {dimension_numbers = #tpu.dot_dimension_numbers<[1], [1], [0], [0], [0, 0, 1, 0], [], []>} : vector<16x16xbf16>, vector<8x16xbf16>, vector<16x8xf32> -> vector<16x8xf32>
    %34 = arith.addf %14, %33 : vector<16x8xf32>
    %35 = vector.extract_strided_slice %10 {offsets = [0, 16], sizes = [8, 16], strides = [1, 1]} : vector<8x64xbf16> to vector<8x16xbf16>
    %36 = vector.extract_strided_slice %11 {offsets = [0, 16], sizes = [8, 16], strides = [1, 1]} : vector<8x64xbf16> to vector<8x16xbf16>
    %37 = vector.extract_strided_slice %12 {offsets = [0, 16], sizes = [8, 16], strides = [1, 1]} : vector<8x64xbf16> to vector<8x16xbf16>
    %cst_19 = arith.constant dense<0.000000e+00> : vector<8x8xf32>
    %38 = tpu.matmul %35, %36, %cst_19 {dimension_numbers = #tpu.dot_dimension_numbers<[1], [1], [0], [0], [0, 0, 1, 0], [], []>} : vector<8x16xbf16>, vector<8x16xbf16>, vector<8x8xf32> -> vector<8x8xf32>
    %cst_20 = arith.constant dense<0xFF800000> : vector<8xf32>
    %39 = vector.multi_reduction <maximumf>, %38, %cst_20 [1] : vector<8x8xf32> to vector<8xf32>
    %40 = vector.shape_cast %39 : vector<8xf32> to vector<8x1xf32>
    %41 = vector.broadcast %40 : vector<8x1xf32> to vector<8x8xf32>
    %42 = arith.subf %38, %41 : vector<8x8xf32>
    %43 = math.exp %42 : vector<8x8xf32>
    %cst_21 = arith.constant dense<0.000000e+00> : vector<8xf32>
    %44 = vector.multi_reduction <add>, %43, %cst_21 [1] : vector<8x8xf32> to vector<8xf32>
    %45 = vector.shape_cast %44 : vector<8xf32> to vector<8x1xf32>
    %46 = tpu.reciprocal %45 {approx = true} : vector<8x1xf32> -> vector<8x1xf32>
    %47 = vector.broadcast %46 : vector<8x1xf32> to vector<8x8xf32>
    %48 = arith.mulf %43, %47 : vector<8x8xf32>
    %49 = arith.truncf %48 : vector<8x8xf32> to vector<8x8xbf16>
    %cst_22 = arith.constant dense<0.000000e+00> : vector<8x16xf32>
    %50 = tpu.matmul %49, %37, %cst_22 {dimension_numbers = #tpu.dot_dimension_numbers<[1], [0], [0], [1], [0, 0, 1, 1], [], []>} : vector<8x8xbf16>, vector<8x16xbf16>, vector<8x16xf32> -> vector<8x16xf32>
    %51 = vector.extract_strided_slice %13 {offsets = [0, 16], sizes = [16, 16], strides = [1, 1]} : vector<16x64xbf16> to vector<16x16xbf16>
    %52 = arith.truncf %50 : vector<8x16xf32> to vector<8x16xbf16>
    %cst_23 = arith.constant dense<0.000000e+00> : vector<16x8xf32>
    %53 = tpu.matmul %51, %52, %cst_23 {dimension_numbers = #tpu.dot_dimension_numbers<[1], [1], [0], [0], [0, 0, 1, 0], [], []>} : vector<16x16xbf16>, vector<8x16xbf16>, vector<16x8xf32> -> vector<16x8xf32>
    %54 = arith.addf %34, %53 : vector<16x8xf32>
    %55 = vector.extract_strided_slice %10 {offsets = [0, 32], sizes = [8, 16], strides = [1, 1]} : vector<8x64xbf16> to vector<8x16xbf16>
    %56 = vector.extract_strided_slice %11 {offsets = [0, 32], sizes = [8, 16], strides = [1, 1]} : vector<8x64xbf16> to vector<8x16xbf16>
    %57 = vector.extract_strided_slice %12 {offsets = [0, 32], sizes = [8, 16], strides = [1, 1]} : vector<8x64xbf16> to vector<8x16xbf16>
    %cst_24 = arith.constant dense<0.000000e+00> : vector<8x8xf32>
    %58 = tpu.matmul %55, %56, %cst_24 {dimension_numbers = #tpu.dot_dimension_numbers<[1], [1], [0], [0], [0, 0, 1, 0], [], []>} : vector<8x16xbf16>, vector<8x16xbf16>, vector<8x8xf32> -> vector<8x8xf32>
    %cst_25 = arith.constant dense<0xFF800000> : vector<8xf32>
    %59 = vector.multi_reduction <maximumf>, %58, %cst_25 [1] : vector<8x8xf32> to vector<8xf32>
    %60 = vector.shape_cast %59 : vector<8xf32> to vector<8x1xf32>
    %61 = vector.broadcast %60 : vector<8x1xf32> to vector<8x8xf32>
    %62 = arith.subf %58, %61 : vector<8x8xf32>
    %63 = math.exp %62 : vector<8x8xf32>
    %cst_26 = arith.constant dense<0.000000e+00> : vector<8xf32>
    %64 = vector.multi_reduction <add>, %63, %cst_26 [1] : vector<8x8xf32> to vector<8xf32>
    %65 = vector.shape_cast %64 : vector<8xf32> to vector<8x1xf32>
    %66 = tpu.reciprocal %65 {approx = true} : vector<8x1xf32> -> vector<8x1xf32>
    %67 = vector.broadcast %66 : vector<8x1xf32> to vector<8x8xf32>
    %68 = arith.mulf %63, %67 : vector<8x8xf32>
    %69 = arith.truncf %68 : vector<8x8xf32> to vector<8x8xbf16>
    %cst_27 = arith.constant dense<0.000000e+00> : vector<8x16xf32>
    %70 = tpu.matmul %69, %57, %cst_27 {dimension_numbers = #tpu.dot_dimension_numbers<[1], [0], [0], [1], [0, 0, 1, 1], [], []>} : vector<8x8xbf16>, vector<8x16xbf16>, vector<8x16xf32> -> vector<8x16xf32>
    %71 = vector.extract_strided_slice %13 {offsets = [0, 32], sizes = [16, 16], strides = [1, 1]} : vector<16x64xbf16> to vector<16x16xbf16>
    %72 = arith.truncf %70 : vector<8x16xf32> to vector<8x16xbf16>
    %cst_28 = arith.constant dense<0.000000e+00> : vector<16x8xf32>
    %73 = tpu.matmul %71, %72, %cst_28 {dimension_numbers = #tpu.dot_dimension_numbers<[1], [1], [0], [0], [0, 0, 1, 0], [], []>} : vector<16x16xbf16>, vector<8x16xbf16>, vector<16x8xf32> -> vector<16x8xf32>
    %74 = arith.addf %54, %73 : vector<16x8xf32>
    %75 = vector.extract_strided_slice %10 {offsets = [0, 48], sizes = [8, 16], strides = [1, 1]} : vector<8x64xbf16> to vector<8x16xbf16>
    %76 = vector.extract_strided_slice %11 {offsets = [0, 48], sizes = [8, 16], strides = [1, 1]} : vector<8x64xbf16> to vector<8x16xbf16>
    %77 = vector.extract_strided_slice %12 {offsets = [0, 48], sizes = [8, 16], strides = [1, 1]} : vector<8x64xbf16> to vector<8x16xbf16>
    %cst_29 = arith.constant dense<0.000000e+00> : vector<8x8xf32>
    %78 = tpu.matmul %75, %76, %cst_29 {dimension_numbers = #tpu.dot_dimension_numbers<[1], [1], [0], [0], [0, 0, 1, 0], [], []>} : vector<8x16xbf16>, vector<8x16xbf16>, vector<8x8xf32> -> vector<8x8xf32>
    %cst_30 = arith.constant dense<0xFF800000> : vector<8xf32>
    %79 = vector.multi_reduction <maximumf>, %78, %cst_30 [1] : vector<8x8xf32> to vector<8xf32>
    %80 = vector.shape_cast %79 : vector<8xf32> to vector<8x1xf32>
    %81 = vector.broadcast %80 : vector<8x1xf32> to vector<8x8xf32>
    %82 = arith.subf %78, %81 : vector<8x8xf32>
    %83 = math.exp %82 : vector<8x8xf32>
    %cst_31 = arith.constant dense<0.000000e+00> : vector<8xf32>
    %84 = vector.multi_reduction <add>, %83, %cst_31 [1] : vector<8x8xf32> to vector<8xf32>
    %85 = vector.shape_cast %84 : vector<8xf32> to vector<8x1xf32>
    %86 = tpu.reciprocal %85 {approx = true} : vector<8x1xf32> -> vector<8x1xf32>
    %87 = vector.broadcast %86 : vector<8x1xf32> to vector<8x8xf32>
    %88 = arith.mulf %83, %87 : vector<8x8xf32>
    %89 = arith.truncf %88 : vector<8x8xf32> to vector<8x8xbf16>
    %cst_32 = arith.constant dense<0.000000e+00> : vector<8x16xf32>
    %90 = tpu.matmul %89, %77, %cst_32 {dimension_numbers = #tpu.dot_dimension_numbers<[1], [0], [0], [1], [0, 0, 1, 1], [], []>} : vector<8x8xbf16>, vector<8x16xbf16>, vector<8x16xf32> -> vector<8x16xf32>
    %91 = vector.extract_strided_slice %13 {offsets = [0, 48], sizes = [16, 16], strides = [1, 1]} : vector<16x64xbf16> to vector<16x16xbf16>
    %92 = arith.truncf %90 : vector<8x16xf32> to vector<8x16xbf16>
    %cst_33 = arith.constant dense<0.000000e+00> : vector<16x8xf32>
    %93 = tpu.matmul %91, %92, %cst_33 {dimension_numbers = #tpu.dot_dimension_numbers<[1], [1], [0], [0], [0, 0, 1, 0], [], []>} : vector<16x16xbf16>, vector<8x16xbf16>, vector<16x8xf32> -> vector<16x8xf32>
    %94 = arith.addf %74, %93 : vector<16x8xf32>
    %c0_34 = arith.constant 0 : index
    %c0_35 = arith.constant 0 : index
    %95 = vector.load %arg11[%c0_34, %c0_35] : memref<16x1xf32, #tpu.memory_space<vmem>>, vector<16x1xf32>
    %96 = vector.broadcast %95 : vector<16x1xf32> to vector<16x8xf32>
    %97 = arith.addf %94, %96 : vector<16x8xf32>
    %c0_36 = arith.constant 0 : index
    %c0_37 = arith.constant 0 : index
    %c0_38 = arith.constant 0 : index
    %c0_39 = arith.constant 0 : index
    %98 = vector.load %arg12[%c0_36, %c0_37, %c0_38, %c0_39] : memref<1x1x16x8xf32, #tpu.memory_space<vmem>>, vector<1x1x16x8xf32>
    %99 = vector.shape_cast %98 : vector<1x1x16x8xf32> to vector<16x8xf32>
    %100 = vector.shape_cast %97 : vector<16x8xf32> to vector<1x1x16x8xf32>
    tpu.vector_store %arg12[%c0_36, %c0_37, %c0_38, %c0_39], %100 {strides = array<i32>} : memref<1x1x16x8xf32, #tpu.memory_space<vmem>>, vector<1x1x16x8xf32>,
    return
  }
  func.func @transform_0(%arg0: i32, %arg1: i32) -> (i32, i32, i32) {
    %c0_i32 = arith.constant 0 : i32
    %c0_i32_0 = arith.constant 0 : i32
    return %arg0, %arg1, %c0_i32 : i32, i32, i32
  }
  func.func @transform_1(%arg0: i32, %arg1: i32) -> (i32, i32, i32) {
    %c0_i32 = arith.constant 0 : i32
    %c0_i32_0 = arith.constant 0 : i32
    %c0_i32_1 = arith.constant 0 : i32
    return %arg0, %c0_i32, %c0_i32_0 : i32, i32, i32
  }
  func.func @transform_2(%arg0: i32, %arg1: i32) -> (i32, i32) {
    %c0_i32 = arith.constant 0 : i32
    %c0_i32_0 = arith.constant 0 : i32
    %c0_i32_1 = arith.constant 0 : i32
    return %c0_i32, %c0_i32_0 : i32, i32
  }
  func.func @transform_3(%arg0: i32, %arg1: i32) -> (i32, i32) {
    %c0_i32 = arith.constant 0 : i32
    %c0_i32_0 = arith.constant 0 : i32
    %c0_i32_1 = arith.constant 0 : i32
    return %c0_i32, %c0_i32_0 : i32, i32
  }
  func.func @transform_4(%arg0: i32, %arg1: i32) -> (i32, i32) {
    %c0_i32 = arith.constant 0 : i32
    %c0_i32_0 = arith.constant 0 : i32
    %c0_i32_1 = arith.constant 0 : i32
    return %c0_i32, %c0_i32_0 : i32, i32
  }
  func.func @transform_5(%arg0: i32, %arg1: i32) -> (i32, i32) {
    %c0_i32 = arith.constant 0 : i32
    %c0_i32_0 = arith.constant 0 : i32
    %c0_i32_1 = arith.constant 0 : i32
    return %c0_i32, %c0_i32_0 : i32, i32
  }
  func.func @transform_6(%arg0: i32, %arg1: i32) -> (i32, i32) {
    %c0_i32 = arith.constant 0 : i32
    %c0_i32_0 = arith.constant 0 : i32
    %c0_i32_1 = arith.constant 0 : i32
    return %c0_i32, %c0_i32_0 : i32, i32
  }
  func.func @transform_7(%arg0: i32, %arg1: i32) -> (i32, i32) {
    %c0_i32 = arith.constant 0 : i32
    %c0_i32_0 = arith.constant 0 : i32
    %c0_i32_1 = arith.constant 0 : i32
    return %c0_i32, %c0_i32_0 : i32, i32
  }
  func.func @transform_8(%arg0: i32, %arg1: i32) -> (i32, i32) {
    %c0_i32 = arith.constant 0 : i32
    %c0_i32_0 = arith.constant 0 : i32
    %c0_i32_1 = arith.constant 0 : i32
    return %c0_i32, %c0_i32_0 : i32, i32
  }
  func.func @transform_9(%arg0: i32, %arg1: i32) -> (i32, i32) {
    %c0_i32 = arith.constant 0 : i32
    %c0_i32_0 = arith.constant 0 : i32
    %c0_i32_1 = arith.constant 0 : i32
    return %c0_i32, %c0_i32_0 : i32, i32
  }
  func.func @transform_10(%arg0: i32, %arg1: i32) -> (i32, i32, i32, i32) {
    %c0_i32 = arith.constant 0 : i32
    %c0_i32_0 = arith.constant 0 : i32
    %c0_i32_1 = arith.constant 0 : i32
    return %arg0, %arg1, %c0_i32, %c0_i32_0 : i32, i32, i32, i32
  }
}

</mosaic_0001>

<llo_original>
// kernel: tpu_custom_call.1
$region0: #{tpu_custom_call.1}
  #allocation0 [shape = 'u32[]', space=smem, size = 0x4, offset = 0x4, fixed_abs, tag = 'smem constant byte address 0x4 - core index']
  #allocation1 [shape = 'u32[144,128]{1,0:T(1,128)}', space=vmem, size = 0x12000, scoped, tag = 'internal scratch']
  #allocation2 [shape = 'bf16[8,64]{1,0:T(8,128)(2,1)}', space=vmem, size = 0x800, scoped, tag = 'scratch operand']
  #allocation3 [shape = 'bf16[8,64]{1,0:T(8,128)(2,1)}', space=vmem, size = 0x800, scoped, tag = 'scratch operand']
  %s0 = inlined_call_operand.hbm [shape: bf16[2,8,32], index: 0, kind: input, shape index: {}]
  %s1 = inlined_call_operand.hbm [shape: bf16[2,8,32], index: 1, kind: input, shape index: {}]
  %s2 = inlined_call_operand.vmem [shape: bf16[32,64], index: 2, kind: input, shape index: {}]
  %s3 = inlined_call_operand.hbm [shape: f32[1,64], index: 3, kind: input, shape index: {}]
  %s4 = inlined_call_operand.vmem [shape: bf16[32,64], index: 4, kind: input, shape index: {}]
  %s5 = inlined_call_operand.vmem [shape: f32[1,64], index: 5, kind: input, shape index: {}]
  %s6 = inlined_call_operand.hbm [shape: bf16[32,64], index: 6, kind: input, shape index: {}]
  %s7 = inlined_call_operand.vmem [shape: f32[1,64], index: 7, kind: input, shape index: {}]
  %s8 = inlined_call_operand.vmem [shape: bf16[16,64], index: 8, kind: input, shape index: {}]
  %s9 = inlined_call_operand.vmem [shape: f32[16,1], index: 9, kind: input, shape index: {}]
  %s10 = inlined_call_operand.vmem [shape: f32[2,1,16,8], index: 10, kind: output, shape index: {}]
  %s11 = sld [smem:[#allocation0]]
  $region93: #{tpu_custom_call.1} parent=0
    _
  %s13 = ssub.s32 1, %s11
  %s14 = scalar_select 0, %s13, %s11
  $region1: #{tpu_custom_call.1} parent=0
    #allocation4 [shape = 'u8[4096]{0}', space=vmem, size = 0x1000, scoped, tag = 'input window, operand 0']
    #allocation5 [shape = 's32[2]{0}', space=sflag, size = 0x8, scoped, tag = 'scoped memory for tpu_custom_call.1']
    #allocation6 [shape = 'u8[4096]{0}', space=vmem, size = 0x1000, scoped, tag = 'input window, operand 1']
    #allocation7 [shape = 's32[2]{0}', space=sflag, size = 0x8, scoped, tag = 'scoped memory for tpu_custom_call.1']
    #allocation8 [shape = 'u8[512]{0}', space=vmem, size = 0x400, scoped, tag = 'input window, operand 3, single buffered']
    #allocation9 [shape = 'u8[8192]{0}', space=vmem, size = 0x2000, scoped, tag = 'input window, operand 6, single buffered']
    #allocation10 [shape = 's32[1]{0}', space=sflag, size = 0x4, scoped, tag = 'scoped memory for tpu_custom_call.1']
    %15 = vsyncpa [#allocation5], 0
    %s16 = scalar_lea.sflag [#allocation5], 1
    %17 = vsyncpa %s16, 0
    %18 = vsyncpa [#allocation7], 0
    %s19 = scalar_lea.sflag [#allocation7], 1
    %20 = vsyncpa %s19, 0
    %21 = vsyncpa [#allocation10], 0
    loop: start=0, step=1, limit=4
    $region2: #{tpu_custom_call.1} parent=1 // loop_pre_header
      _
    $region3: #{tpu_custom_call.1} parent=1 // loop_header
      %s23 = sphi 0, %s27
      %p24 = scmp.ge.s32.totalorder %s23, 4
      %s30 = sphi 0, %s42
      %s31 = sphi 0, %s38
      %s32 = sphi 0, %s30
      %s33 = sphi 0, %s31
      %s34 = sphi 0, %s32
      %s35 = sphi 0, %s33
      %s47 = sphi 0, %s49
      %s50 = sphi 0, %s47
      %s51 = sphi 0, %s50
      %s67 = sphi 0, %s51
      %s73 = sphi 0, %s75
      %s76 = sphi 0, %s73
      %s77 = sphi 0, %s76
      %s93 = sphi 0, %s77
      %s97 = sphi 0, %s97
      %s99 = sphi 0, %s97
      %s100 = sphi 0, %s99
      %s114 = sphi 0, %s100
      %s118 = sphi 0, %s118
      %s120 = sphi 0, %s118
      %s121 = sphi 0, %s120
      %s135 = sphi 0, %s121
      %s139 = sphi 0, %s139
      %s141 = sphi 0, %s139
      %s142 = sphi 0, %s141
      %s156 = sphi 0, %s142
      %s160 = sphi 0, %s160
      %s162 = sphi 0, %s160
      %s163 = sphi 0, %s162
      %s177 = sphi 0, %s163
      %s181 = sphi 0, %s181
      %s183 = sphi 0, %s181
      %s184 = sphi 0, %s183
      %s198 = sphi 0, %s184
      %s202 = sphi 0, %s202
      %s204 = sphi 0, %s202
      %s205 = sphi 0, %s204
      %s219 = sphi 0, %s205
      %s223 = sphi 0, %s223
      %s225 = sphi 0, %s223
      %s226 = sphi 0, %s225
      %s240 = sphi 0, %s226
      %s244 = sphi 0, %s244
      %s246 = sphi 0, %s244
      %s247 = sphi 0, %s246
      %s261 = sphi 0, %s247
      %s269 = sphi 0, %s271
      %s272 = sphi 0, %s269
      %s273 = sphi 0, %s272
      %s289 = sphi 0, %s273
    $region4: #{tpu_custom_call.1} parent=1 // loop_header_branch
      %26 = sbr.rel (%p24) target = $region8
    $region5: #{tpu_custom_call.1} parent=1 // loop_body
      %s28 = ssub.s32 %s23, 1
      %s29 = ssub.s32 %s23, 2
      %s36 = sadd.s32 1, %s31
      %p37 = scmp.ge.s32.totalorder %s36, 1
      %s38 = scalar_select %p37, 0, %s36
      %s39 = sadd.s32 1, %s30
      %s40 = scalar_select %p37, %s39, %s30
      %p41 = scmp.ge.s32.totalorder %s40, 2
      %s42 = scalar_select %p41, 0, %s40
      %s43 = ssub.s32 %s30, %s42
      %s44 = ssub.s32 %s31, %s38
      %s45 = sor.u32 %s43, %s44
      %p46 = scmp.eq.s32.totalorder %s45, 0
      %s48 = sadd.s32 %s47, 1
      %s49 = scalar_select %p46, %s47, %s48
      %p52 = pneg %p46
      %p53 = scmp.eq.s32.totalorder %s23, 1
      %p54 = por %p52, %p53
      %p55 = scmp.ne.s32.totalorder %s47, %s50
      %p56 = scmp.eq.s32.totalorder %s23, 0
      %p57 = por %p55, %p56
      %p58 = scmp.ne.s32.totalorder %s47, %s50
      %p59 = scmp.eq.s32.totalorder %s28, 1
      %p60 = por %p58, %p59
      %p61 = scmp.ne.s32.totalorder %s50, %s51
      %p62 = scmp.eq.s32.totalorder %s28, 0
      %p63 = por %p61, %p62
      %p64 = scmp.ne.s32.totalorder %s50, %s51
      %p65 = scmp.eq.s32.totalorder %s29, 1
      %p66 = por %p64, %p65
      %p68 = scmp.ne.s32.totalorder %s51, %s67
      %p69 = scmp.eq.s32.totalorder %s29, 0
      %p70 = por %p68, %p69
      %s71 = ssub.s32 %s30, %s42
      %p72 = scmp.eq.s32.totalorder %s71, 0
      %s74 = sadd.s32 %s73, 1
      %s75 = scalar_select %p72, %s73, %s74
      %p78 = pneg %p72
      %p79 = scmp.eq.s32.totalorder %s23, 1
      %p80 = por %p78, %p79
      %p81 = scmp.ne.s32.totalorder %s73, %s76
      %p82 = scmp.eq.s32.totalorder %s23, 0
      %p83 = por %p81, %p82
      %p84 = scmp.ne.s32.totalorder %s73, %s76
      %p85 = scmp.eq.s32.totalorder %s28, 1
      %p86 = por %p84, %p85
      %p87 = scmp.ne.s32.totalorder %s76, %s77
      %p88 = scmp.eq.s32.totalorder %s28, 0
      %p89 = por %p87, %p88
      %p90 = scmp.ne.s32.totalorder %s76, %s77
      %p91 = scmp.eq.s32.totalorder %s29, 1
      %p92 = por %p90, %p91
      %p94 = scmp.ne.s32.totalorder %s77, %s93
      %p95 = scmp.eq.s32.totalorder %s29, 0
      %p96 = por %p94, %p95
      %s98 = sadd.s32 %s97, 1
      %p101 = scmp.eq.s32.totalorder %s23, 1
      %p102 = scmp.ne.s32.totalorder %s97, %s99
      %p103 = scmp.eq.s32.totalorder %s23, 0
      %p104 = por %p102, %p103
      %p105 = scmp.ne.s32.totalorder %s97, %s99
      %p106 = scmp.eq.s32.totalorder %s28, 1
      %p107 = por %p105, %p106
      %p108 = scmp.ne.s32.totalorder %s99, %s100
      %p109 = scmp.eq.s32.totalorder %s28, 0
      %p110 = por %p108, %p109
      %p111 = scmp.ne.s32.totalorder %s99, %s100
      %p112 = scmp.eq.s32.totalorder %s29, 1
      %p113 = por %p111, %p112
      %p115 = scmp.ne.s32.totalorder %s100, %s114
      %p116 = scmp.eq.s32.totalorder %s29, 0
      %p117 = por %p115, %p116
      %s119 = sadd.s32 %s118, 1
      %p122 = scmp.eq.s32.totalorder %s23, 1
      %p123 = scmp.ne.s32.totalorder %s118, %s120
      %p124 = scmp.eq.s32.totalorder %s23, 0
      %p125 = por %p123, %p124
      %p126 = scmp.ne.s32.totalorder %s118, %s120
      %p127 = scmp.eq.s32.totalorder %s28, 1
      %p128 = por %p126, %p127
      %p129 = scmp.ne.s32.totalorder %s120, %s121
      %p130 = scmp.eq.s32.totalorder %s28, 0
      %p131 = por %p129, %p130
      %p132 = scmp.ne.s32.totalorder %s120, %s121
      %p133 = scmp.eq.s32.totalorder %s29, 1
      %p134 = por %p132, %p133
      %p136 = scmp.ne.s32.totalorder %s121, %s135
      %p137 = scmp.eq.s32.totalorder %s29, 0
      %p138 = por %p136, %p137
      %s140 = sadd.s32 %s139, 1
      %p143 = scmp.eq.s32.totalorder %s23, 1
      %p144 = scmp.ne.s32.totalorder %s139, %s141
      %p145 = scmp.eq.s32.totalorder %s23, 0
      %p146 = por %p144, %p145
      %p147 = scmp.ne.s32.totalorder %s139, %s141
      %p148 = scmp.eq.s32.totalorder %s28, 1
      %p149 = por %p147, %p148
      %p150 = scmp.ne.s32.totalorder %s141, %s142
      %p151 = scmp.eq.s32.totalorder %s28, 0
      %p152 = por %p150, %p151
      %p153 = scmp.ne.s32.totalorder %s141, %s142
      %p154 = scmp.eq.s32.totalorder %s29, 1
      %p155 = por %p153, %p154
      %p157 = scmp.ne.s32.totalorder %s142, %s156
      %p158 = scmp.eq.s32.totalorder %s29, 0
      %p159 = por %p157, %p158
      %s161 = sadd.s32 %s160, 1
      %p164 = scmp.eq.s32.totalorder %s23, 1
      %p165 = scmp.ne.s32.totalorder %s160, %s162
      %p166 = scmp.eq.s32.totalorder %s23, 0
      %p167 = por %p165, %p166
      %p168 = scmp.ne.s32.totalorder %s160, %s162
      %p169 = scmp.eq.s32.totalorder %s28, 1
      %p170 = por %p168, %p169
      %p171 = scmp.ne.s32.totalorder %s162, %s163
      %p172 = scmp.eq.s32.totalorder %s28, 0
      %p173 = por %p171, %p172
      %p174 = scmp.ne.s32.totalorder %s162, %s163
      %p175 = scmp.eq.s32.totalorder %s29, 1
      %p176 = por %p174, %p175
      %p178 = scmp.ne.s32.totalorder %s163, %s177
      %p179 = scmp.eq.s32.totalorder %s29, 0
      %p180 = por %p178, %p179
      %s182 = sadd.s32 %s181, 1
      %p185 = scmp.eq.s32.totalorder %s23, 1
      %p186 = scmp.ne.s32.totalorder %s181, %s183
      %p187 = scmp.eq.s32.totalorder %s23, 0
      %p188 = por %p186, %p187
      %p189 = scmp.ne.s32.totalorder %s181, %s183
      %p190 = scmp.eq.s32.totalorder %s28, 1
      %p191 = por %p189, %p190
      %p192 = scmp.ne.s32.totalorder %s183, %s184
      %p193 = scmp.eq.s32.totalorder %s28, 0
      %p194 = por %p192, %p193
      %p195 = scmp.ne.s32.totalorder %s183, %s184
      %p196 = scmp.eq.s32.totalorder %s29, 1
      %p197 = por %p195, %p196
      %p199 = scmp.ne.s32.totalorder %s184, %s198
      %p200 = scmp.eq.s32.totalorder %s29, 0
      %p201 = por %p199, %p200
      %s203 = sadd.s32 %s202, 1
      %p206 = scmp.eq.s32.totalorder %s23, 1
      %p207 = scmp.ne.s32.totalorder %s202, %s204
      %p208 = scmp.eq.s32.totalorder %s23, 0
      %p209 = por %p207, %p208
      %p210 = scmp.ne.s32.totalorder %s202, %s204
      %p211 = scmp.eq.s32.totalorder %s28, 1
      %p212 = por %p210, %p211
      %p213 = scmp.ne.s32.totalorder %s204, %s205
      %p214 = scmp.eq.s32.totalorder %s28, 0
      %p215 = por %p213, %p214
      %p216 = scmp.ne.s32.totalorder %s204, %s205
      %p217 = scmp.eq.s32.totalorder %s29, 1
      %p218 = por %p216, %p217
      %p220 = scmp.ne.s32.totalorder %s205, %s219
      %p221 = scmp.eq.s32.totalorder %s29, 0
      %p222 = por %p220, %p221
      %s224 = sadd.s32 %s223, 1
      %p227 = scmp.eq.s32.totalorder %s23, 1
      %p228 = scmp.ne.s32.totalorder %s223, %s225
      %p229 = scmp.eq.s32.totalorder %s23, 0
      %p230 = por %p228, %p229
      %p231 = scmp.ne.s32.totalorder %s223, %s225
      %p232 = scmp.eq.s32.totalorder %s28, 1
      %p233 = por %p231, %p232
      %p234 = scmp.ne.s32.totalorder %s225, %s226
      %p235 = scmp.eq.s32.totalorder %s28, 0
      %p236 = por %p234, %p235
      %p237 = scmp.ne.s32.totalorder %s225, %s226
      %p238 = scmp.eq.s32.totalorder %s29, 1
      %p239 = por %p237, %p238
      %p241 = scmp.ne.s32.totalorder %s226, %s240
      %p242 = scmp.eq.s32.totalorder %s29, 0
      %p243 = por %p241, %p242
      %s245 = sadd.s32 %s244, 1
      %p248 = scmp.eq.s32.totalorder %s23, 1
      %p249 = scmp.ne.s32.totalorder %s244, %s246
      %p250 = scmp.eq.s32.totalorder %s23, 0
      %p251 = por %p249, %p250
      %p252 = scmp.ne.s32.totalorder %s244, %s246
      %p253 = scmp.eq.s32.totalorder %s28, 1
      %p254 = por %p252, %p253
      %p255 = scmp.ne.s32.totalorder %s246, %s247
      %p256 = scmp.eq.s32.totalorder %s28, 0
      %p257 = por %p255, %p256
      %p258 = scmp.ne.s32.totalorder %s246, %s247
      %p259 = scmp.eq.s32.totalorder %s29, 1
      %p260 = por %p258, %p259
      %p262 = scmp.ne.s32.totalorder %s247, %s261
      %p263 = scmp.eq.s32.totalorder %s29, 0
      %p264 = por %p262, %p263
      %s265 = ssub.s32 %s30, %s42
      %s266 = ssub.s32 %s31, %s38
      %s267 = sor.u32 %s265, %s266
      %p268 = scmp.eq.s32.totalorder %s267, 0
      %s270 = sadd.s32 %s269, 1
      %s271 = scalar_select %p268, %s269, %s270
      %p274 = pneg %p268
      %p275 = scmp.eq.s32.totalorder %s23, 1
      %p276 = por %p274, %p275
      %p277 = scmp.ne.s32.totalorder %s269, %s272
      %p278 = scmp.eq.s32.totalorder %s23, 0
      %p279 = por %p277, %p278
      %p280 = scmp.ne.s32.totalorder %s269, %s272
      %p281 = scmp.eq.s32.totalorder %s28, 1
      %p282 = por %p280, %p281
      %p283 = scmp.ne.s32.totalorder %s272, %s273
      %p284 = scmp.eq.s32.totalorder %s28, 0
      %p285 = por %p283, %p284
      %p286 = scmp.ne.s32.totalorder %s272, %s273
      %p287 = scmp.eq.s32.totalorder %s29, 1
      %p288 = por %p286, %p287
      %p290 = scmp.ne.s32.totalorder %s273, %s289
      %p291 = scmp.eq.s32.totalorder %s29, 0
      %p292 = por %p290, %p291
      %p293 = scmp.le.s32.totalorder 1, %s23
      %p294 = scmp.lt.s32.totalorder %s23, 3
      %p295 = pnand %p293, %p294
      %p296 = pneg %p295
      // Predicated region
      $region9: #{tpu_custom_call.1} parent=5 // pred_check
        _
      $region10: #{tpu_custom_call.1} parent=5 // pred_check_branch
        %298 = sbr.rel (%p295) target = $region12
      $region11: #{tpu_custom_call.1} parent=5 // pred_region
        %s299 = ssub.s32 %s23, 1
        // Predicated region
        $region13: #{tpu_custom_call.1} parent=11 // pred_check
          %p300 = pneg %p110
        $region14: #{tpu_custom_call.1} parent=11 // pred_check_branch
          %302 = sbr.rel (%p300) target = $region16
        $region15: #{tpu_custom_call.1} parent=11 // pred_region
          _
        $region16: #{tpu_custom_call.1} parent=11 // pred_fallthru
          _
        // Predicated region
        $region17: #{tpu_custom_call.1} parent=11 // pred_check
          %p303 = pneg %p131
        $region18: #{tpu_custom_call.1} parent=11 // pred_check_branch
          %305 = sbr.rel (%p303) target = $region20
        $region19: #{tpu_custom_call.1} parent=11 // pred_region
          %s307 = ssub.s32 16, 16
          %308 = vsyncadd [#allocation7], %s307
          %s310 = sshll.u32 [#allocation8], 4
          %s311 = int_to_ptr.vmem [resolvable:$true] %s310
          %313 = dma.hbm_to_vmem [thread:$0]  %s3, 16, %s311, [#allocation7]
        $region20: #{tpu_custom_call.1} parent=11 // pred_fallthru
          _
        // Predicated region
        $region21: #{tpu_custom_call.1} parent=11 // pred_check
          %p314 = pneg %p152
        $region22: #{tpu_custom_call.1} parent=11 // pred_check_branch
          %316 = sbr.rel (%p314) target = $region24
        $region23: #{tpu_custom_call.1} parent=11 // pred_region
          _
        $region24: #{tpu_custom_call.1} parent=11 // pred_fallthru
          _
        // Predicated region
        $region25: #{tpu_custom_call.1} parent=11 // pred_check
          %p317 = pneg %p173
        $region26: #{tpu_custom_call.1} parent=11 // pred_check_branch
          %319 = sbr.rel (%p317) target = $region28
        $region27: #{tpu_custom_call.1} parent=11 // pred_region
          _
        $region28: #{tpu_custom_call.1} parent=11 // pred_fallthru
          _
        // Predicated region
        $region29: #{tpu_custom_call.1} parent=11 // pred_check
          %p320 = pneg %p194
        $region30: #{tpu_custom_call.1} parent=11 // pred_check_branch
          %322 = sbr.rel (%p320) target = $region32
        $region31: #{tpu_custom_call.1} parent=11 // pred_region
          %s324 = ssub.s32 256, 256
          %325 = vsyncadd [#allocation10], %s324
          %s326 = sshll.u32 [#allocation9], 4
          %s327 = int_to_ptr.vmem [resolvable:$true] %s326
          %332 = dma.hbm_to_vmem [thread:$0]  %s6, 256, %s327, [#allocation10], 64, 64, 4
        $region32: #{tpu_custom_call.1} parent=11 // pred_fallthru
          _
        // Predicated region
        $region33: #{tpu_custom_call.1} parent=11 // pred_check
          %p333 = pneg %p215
        $region34: #{tpu_custom_call.1} parent=11 // pred_check_branch
          %335 = sbr.rel (%p333) target = $region36
        $region35: #{tpu_custom_call.1} parent=11 // pred_region
          _
        $region36: #{tpu_custom_call.1} parent=11 // pred_fallthru
          _
        // Predicated region
        $region37: #{tpu_custom_call.1} parent=11 // pred_check
          %p336 = pneg %p236
        $region38: #{tpu_custom_call.1} parent=11 // pred_check_branch
          %338 = sbr.rel (%p336) target = $region40
        $region39: #{tpu_custom_call.1} parent=11 // pred_region
          _
        $region40: #{tpu_custom_call.1} parent=11 // pred_fallthru
          _
        // Predicated region
        $region41: #{tpu_custom_call.1} parent=11 // pred_check
          %p339 = pneg %p257
        $region42: #{tpu_custom_call.1} parent=11 // pred_check_branch
          %341 = sbr.rel (%p339) target = $region44
        $region43: #{tpu_custom_call.1} parent=11 // pred_region
          _
        $region44: #{tpu_custom_call.1} parent=11 // pred_fallthru
          _
      $region12: #{tpu_custom_call.1} parent=5 // pred_fallthru
        _
      %p342 = scmp.lt.s32.totalorder %s23, 2
      // Predicated region
      $region45: #{tpu_custom_call.1} parent=5 // pred_check
        %p343 = pneg %p342
      $region46: #{tpu_custom_call.1} parent=5 // pred_check_branch
        %345 = sbr.rel (%p343) target = $region48
      $region47: #{tpu_custom_call.1} parent=5 // pred_region
        // Predicated region
        $region49: #{tpu_custom_call.1} parent=47 // pred_check
          %p346 = pneg %p57
        $region50: #{tpu_custom_call.1} parent=47 // pred_check_branch
          %348 = sbr.rel (%p346) target = $region52
        $region51: #{tpu_custom_call.1} parent=47 // pred_region
          %s349 = sand.u32 %s47, 1
          %s350 = scalar_lea.sflag [#allocation5], %s349
          %s351 = sand.u32 %s47, 1
          %s352 = smul.addr %s351, 4
          %s353 = scalar_lea.vmem [#allocation4], %s352
          %s355 = ssub.s32 64, 64
          %356 = vsyncadd %s350, %s355
          %s357 = sadd.s32 %s31, %s30
          %s358 = smul.addr %s357, 64
          %s359 = scalar_lea.hbm %s0, %s358
          %s361 = sshll.u32 %s353, 4
          %s362 = int_to_ptr.vmem [resolvable:$true] %s361
          %364 = dma.hbm_to_vmem [thread:$0]  %s359, 64, %s362, %s350
        $region52: #{tpu_custom_call.1} parent=47 // pred_fallthru
          _
        // Predicated region
        $region53: #{tpu_custom_call.1} parent=47 // pred_check
          %p365 = pneg %p83
        $region54: #{tpu_custom_call.1} parent=47 // pred_check_branch
          %367 = sbr.rel (%p365) target = $region56
        $region55: #{tpu_custom_call.1} parent=47 // pred_region
          %s368 = sand.u32 %s23, 1
          %s369 = scalar_lea.sflag [#allocation7], %s368
          %s370 = sand.u32 %s73, 1
          %s371 = smul.addr %s370, 4
          %s372 = scalar_lea.vmem [#allocation6], %s371
          %s374 = ssub.s32 64, 64
          %375 = vsyncadd %s369, %s374
          %s376 = smul.addr %s30, 64
          %s377 = scalar_lea.hbm %s1, %s376
          %s379 = sshll.u32 %s372, 4
          %s380 = int_to_ptr.vmem [resolvable:$true] %s379
          %382 = dma.hbm_to_vmem [thread:$0]  %s377, 64, %s380, %s369
        $region56: #{tpu_custom_call.1} parent=47 // pred_fallthru
          _
      $region48: #{tpu_custom_call.1} parent=5 // pred_fallthru
        _
      %p383 = scmp.le.s32.totalorder 1, %s23
      %p384 = scmp.lt.s32.totalorder %s23, 3
      %p385 = pnand %p383, %p384
      %p386 = pneg %p385
      // Predicated region
      $region57: #{tpu_custom_call.1} parent=5 // pred_check
        _
      $region58: #{tpu_custom_call.1} parent=5 // pred_check_branch
        %388 = sbr.rel (%p385) target = $region60
      $region59: #{tpu_custom_call.1} parent=5 // pred_region
        %s389 = ssub.s32 %s23, 1
        %s390 = sand.u32 %s50, 1
        %s391 = scalar_lea.sflag [#allocation5], %s390
        %s392 = sand.u32 %s50, 1
        %s393 = smul.addr %s392, 4
        %s394 = scalar_lea.vmem [#allocation4], %s393
        // Predicated region
        $region61: #{tpu_custom_call.1} parent=59 // pred_check
          %p395 = pneg %p63
        $region62: #{tpu_custom_call.1} parent=59 // pred_check_branch
          %397 = sbr.rel (%p395) target = $region64
        $region63: #{tpu_custom_call.1} parent=59 // pred_region
          %398 = dma.done %s391, 64
        $region64: #{tpu_custom_call.1} parent=59 // pred_fallthru
          _
        %s399 = sand.u32 %s28, 1
        %s400 = scalar_lea.sflag [#allocation7], %s399
        %s401 = sand.u32 %s76, 1
        %s402 = smul.addr %s401, 4
        %s403 = scalar_lea.vmem [#allocation6], %s402
        // Predicated region
        $region65: #{tpu_custom_call.1} parent=59 // pred_check
          %p404 = pneg %p89
        $region66: #{tpu_custom_call.1} parent=59 // pred_check_branch
          %406 = sbr.rel (%p404) target = $region68
        $region67: #{tpu_custom_call.1} parent=59 // pred_region
          %407 = dma.done %s400, 64
        $region68: #{tpu_custom_call.1} parent=59 // pred_fallthru
          _
        // Predicated region
        $region69: #{tpu_custom_call.1} parent=59 // pred_check
          %p408 = pneg %p131
        $region70: #{tpu_custom_call.1} parent=59 // pred_check_branch
          %410 = sbr.rel (%p408) target = $region72
        $region71: #{tpu_custom_call.1} parent=59 // pred_region
          %411 = dma.done [#allocation7], 16
        $region72: #{tpu_custom_call.1} parent=59 // pred_fallthru
          _
        // Predicated region
        $region73: #{tpu_custom_call.1} parent=59 // pred_check
          %p412 = pneg %p194
        $region74: #{tpu_custom_call.1} parent=59 // pred_check_branch
          %414 = sbr.rel (%p412) target = $region76
        $region75: #{tpu_custom_call.1} parent=59 // pred_region
          %415 = dma.done [#allocation10], 256
        $region76: #{tpu_custom_call.1} parent=59 // pred_fallthru
          _
        %s416 = sand.u32 %s50, 1
        %s417 = scalar_lea.sflag [#allocation5], %s416
        %s418 = sand.u32 %s50, 1
        %s419 = smul.addr %s418, 4
        %s420 = scalar_lea.vmem [#allocation4], %s419
        %p421 = pneg %p63
        %p422 = pneg %p60
        %s423 = sand.u32 %s28, 1
        %s424 = scalar_lea.sflag [#allocation7], %s423
        %s425 = sand.u32 %s76, 1
        %s426 = smul.addr %s425, 4
        %s427 = scalar_lea.vmem [#allocation6], %s426
        %p428 = pneg %p89
        %p429 = pneg %p86
        %p430 = pneg %p110
        %p431 = pneg %p107
        %p432 = pneg %p131
        %p433 = pneg %p128
        %p434 = pneg %p152
        %p435 = pneg %p149
        %p436 = pneg %p173
        %p437 = pneg %p170
        %p438 = pneg %p194
        %p439 = pneg %p191
        %p440 = pneg %p215
        %p441 = pneg %p212
        %p442 = pneg %p236
        %p443 = pneg %p233
        %p444 = pneg %p257
        %p445 = pneg %p254
        %p446 = pneg %p285
        %p447 = pneg %p282
        %p448 = scmp.lt.s32.totalorder %s32, 1
        %s449 = scalar_select %p448, %s32, 1
        %p450 = scmp.lt.s32.totalorder %s33, 0
        %s451 = scalar_select %p450, %s33, 0
        %s452 = smul.addr %s451, 2
        %s453 = smul.addr %s449, 2
        %s454 = sadd.s32 %s452, %s453
        %s455 = smul.addr %s454, 8
        %s456 = scalar_lea.vmem %s10, %s455
        %p457 = scmp.lt.s32.totalorder %s32, 1
        %s458 = scalar_select %p457, %s32, 1
        %p459 = scmp.lt.s32.totalorder %s33, 0
        %s460 = scalar_select %p459, %s33, 0
        %s461 = smul.addr %s460, 2
        %s462 = smul.addr %s458, 2
        %s463 = sadd.s32 %s461, %s462
        %s464 = smul.addr %s463, 8
        %s465 = scalar_lea.vmem %s10, %s464
        %p467 = scmp.eq.s32.totalorder %s33, 0
        // Predicated region
        $region77: #{tpu_custom_call.1} parent=59 // pred_check
          %p468 = pneg %p467
        $region78: #{tpu_custom_call.1} parent=59 // pred_check_branch
          %470 = sbr.rel (%p468) target = $region80
        $region79: #{tpu_custom_call.1} parent=59 // pred_region
          %v471 = vld [vmem:[%s403] sm:$0xf]
          %v472 = vld [vmem:[%s4] sm:$0xf]
          %v473 = vld [vmem:[%s4 + $0x4] sm:$0xf]
          %v474 = vld [vmem:[%s4 + $0x8] sm:$0xf]
          %v475 = vld [vmem:[%s4 + $0xc] sm:$0xf]
          %v476 = vld [vmem:[%s5] sm:$0x1]
          %v478 = vlaneseq
          %v479 = vshrl.u32 %v478, 7
          %v480 = vsub.s32 0, %v479
          %v481 = vrot.slane %v476, %v480
          %v487 = vunpack.c.l.b16 %v472
          %v488 = vunpack.c.l.b16 %v473
          %v489 = vunpack.c.l.b16 %v474
          %v490 = vunpack.c.l.b16 %v475
          %v491 = vpack.c.b16 %v488, %v487
          %v492 = vpack.c.b16 %v490, %v489
          %vm495 = vcmask 261120
          %v497 = vsel %vm495, %v471, 0
          %499 = vmatprep.subr.bf16.mxu0 0
          %500 = vmatpush1.bf16.msra.mxu0 %v491
          %501 = vmatprep.subr.bf16.mxu0 0
          %502 = vmatpush1.bf16.msra.mxu0 %v492
          %503 = vmatprep.subr.bf16.mxu0 0
          %504 = vmatpush1.bf16.msra.mxu0 0
          %505 = vmatprep.subr.bf16.mxu0 0
          %506 = vmatpush1.bf16.msra.mxu0 0
          %507 = vmatprep.subr.bf16.mxu0 0
          %508 = vmatpush1.bf16.msra.mxu0 0
          %509 = vmatprep.subr.bf16.mxu0 0
          %510 = vmatpush1.bf16.msra.mxu0 0
          %511 = vmatprep.subr.bf16.mxu0 0
          %512 = vmatpush1.bf16.msra.mxu0 0
          %513 = vmatprep.subr.bf16.mxu0 0
          %514 = vmatpush1.bf16.msra.mxu0 0
          %515 = vmatprep.subr.bf16.mxu0 0
          %516 = vmatpush1.bf16.msra.mxu0 0
          %517 = vmatprep.subr.bf16.mxu0 0
          %518 = vmatpush1.bf16.msra.mxu0 0
          %519 = vmatprep.subr.bf16.mxu0 0
          %520 = vmatpush1.bf16.msra.mxu0 0
          %521 = vmatprep.subr.bf16.mxu0 0
          %522 = vmatpush1.bf16.msra.mxu0 0
          %523 = vmatprep.subr.bf16.mxu0 0
          %524 = vmatpush1.bf16.msra.mxu0 0
          %525 = vmatprep.subr.bf16.mxu0 0
          %526 = vmatpush1.bf16.msra.mxu0 0
          %527 = vmatprep.subr.bf16.mxu0 0
          %528 = vmatpush1.bf16.msra.mxu0 0
          %529 = vmatprep.subr.bf16.mxu0 0
          %530 = vmatpush1.bf16.msra.mxu0 0
          %531 = vmatprep.mubr.bf16.mxu0 0
          %532 = vmatmul.mubr.bf16.gmra.mrb[0].mxu0 %v497
          %v533 = vpop.f32.mrb[0].mxu0
          %v534 = vadd.f32 %v481, %v533
          %v535 = vpop.f32.mrb[0].mxu0
          %v536 = vpop.f32.mrb[0].mxu0
          %v537 = vpop.f32.mrb[0].mxu0
          %538 = vdwg.mxu0
          %v539 = vld [vmem:[#allocation9] sm:$0xf]
          %v540 = vld [vmem:[#allocation9 + $0x4] sm:$0xf]
          %v541 = vld [vmem:[#allocation9 + $0x8] sm:$0xf]
          %v542 = vld [vmem:[#allocation9 + $0xc] sm:$0xf]
          %v543 = vld [vmem:[%s7] sm:$0x1]
          %v545 = vlaneseq
          %v546 = vshrl.u32 %v545, 7
          %v547 = vsub.s32 0, %v546
          %v548 = vrot.slane %v543, %v547
          %v554 = vunpack.c.l.b16 %v539
          %v555 = vunpack.c.l.b16 %v540
          %v556 = vunpack.c.l.b16 %v541
          %v557 = vunpack.c.l.b16 %v542
          %v558 = vpack.c.b16 %v555, %v554
          %v559 = vpack.c.b16 %v557, %v556
          %562 = vmatprep.subr.bf16.mxu0 0
          %563 = vmatpush1.bf16.msra.mxu0 %v558
          %564 = vmatprep.subr.bf16.mxu0 0
          %565 = vmatpush1.bf16.msra.mxu0 %v559
          %566 = vmatprep.subr.bf16.mxu0 0
          %567 = vmatpush1.bf16.msra.mxu0 0
          %568 = vmatprep.subr.bf16.mxu0 0
          %569 = vmatpush1.bf16.msra.mxu0 0
          %570 = vmatprep.subr.bf16.mxu0 0
          %571 = vmatpush1.bf16.msra.mxu0 0
          %572 = vmatprep.subr.bf16.mxu0 0
          %573 = vmatpush1.bf16.msra.mxu0 0
          %574 = vmatprep.subr.bf16.mxu0 0
          %575 = vmatpush1.bf16.msra.mxu0 0
          %576 = vmatprep.subr.bf16.mxu0 0
          %577 = vmatpush1.bf16.msra.mxu0 0
          %578 = vmatprep.subr.bf16.mxu0 0
          %579 = vmatpush1.bf16.msra.mxu0 0
          %580 = vmatprep.subr.bf16.mxu0 0
          %581 = vmatpush1.bf16.msra.mxu0 0
          %582 = vmatprep.subr.bf16.mxu0 0
          %583 = vmatpush1.bf16.msra.mxu0 0
          %584 = vmatprep.subr.bf16.mxu0 0
          %585 = vmatpush1.bf16.msra.mxu0 0
          %586 = vmatprep.subr.bf16.mxu0 0
          %587 = vmatpush1.bf16.msra.mxu0 0
          %588 = vmatprep.subr.bf16.mxu0 0
          %589 = vmatpush1.bf16.msra.mxu0 0
          %590 = vmatprep.subr.bf16.mxu0 0
          %591 = vmatpush1.bf16.msra.mxu0 0
          %592 = vmatprep.subr.bf16.mxu0 0
          %593 = vmatpush1.bf16.msra.mxu0 0
          %594 = vmatprep.mubr.bf16.mxu0 0
          %595 = vmatmul.mubr.bf16.gmra.mrb[0].mxu0 %v497
          %v596 = vpop.f32.mrb[0].mxu0
          %v597 = vadd.f32 %v548, %v596
          %v598 = vpop.f32.mrb[0].mxu0
          %v599 = vpop.f32.mrb[0].mxu0
          %v600 = vpop.f32.mrb[0].mxu0
          %601 = vdwg.mxu0
          %v602 = vpack.c.bf16 %v534, %v534
          %vm603 = vcmask 519168
          %604 = vst.msk [vmem:[#allocation2] sm:$0xf] %vm603, %v602
          %v605 = vpack.c.bf16 %v597, %v597
          %606 = vst.msk [vmem:[#allocation3] sm:$0xf] %vm603, %v605
        $region80: #{tpu_custom_call.1} parent=59 // pred_fallthru
          _
        %v607 = vld [vmem:[%s394] sm:$0xf]
        %v608 = vld [vmem:[%s2] sm:$0xf]
        %v609 = vld [vmem:[%s2 + $0x4] sm:$0xf]
        %v610 = vld [vmem:[%s2 + $0x8] sm:$0xf]
        %v611 = vld [vmem:[%s2 + $0xc] sm:$0xf]
        %v612 = vld [vmem:[#allocation8] sm:$0x1]
        %v614 = vlaneseq
        %v615 = vshrl.u32 %v614, 7
        %v616 = vsub.s32 0, %v615
        %v617 = vrot.slane %v612, %v616
        %v623 = vunpack.c.l.b16 %v608
        %v624 = vunpack.c.l.b16 %v609
        %v625 = vunpack.c.l.b16 %v610
        %v626 = vunpack.c.l.b16 %v611
        %v627 = vpack.c.b16 %v624, %v623
        %v628 = vpack.c.b16 %v626, %v625
        %vm631 = vcmask 261120
        %v633 = vsel %vm631, %v607, 0
        %635 = vmatprep.subr.bf16.mxu0 0
        %636 = vmatpush1.bf16.msra.mxu0 %v627
        %637 = vmatprep.subr.bf16.mxu0 0
        %638 = vmatpush1.bf16.msra.mxu0 %v628
        %639 = vmatprep.subr.bf16.mxu0 0
        %640 = vmatpush1.bf16.msra.mxu0 0
        %641 = vmatprep.subr.bf16.mxu0 0
        %642 = vmatpush1.bf16.msra.mxu0 0
        %643 = vmatprep.subr.bf16.mxu0 0
        %644 = vmatpush1.bf16.msra.mxu0 0
        %645 = vmatprep.subr.bf16.mxu0 0
        %646 = vmatpush1.bf16.msra.mxu0 0
        %647 = vmatprep.subr.bf16.mxu0 0
        %648 = vmatpush1.bf16.msra.mxu0 0
        %649 = vmatprep.subr.bf16.mxu0 0
        %650 = vmatpush1.bf16.msra.mxu0 0
        %651 = vmatprep.subr.bf16.mxu0 0
        %652 = vmatpush1.bf16.msra.mxu0 0
        %653 = vmatprep.subr.bf16.mxu0 0
        %654 = vmatpush1.bf16.msra.mxu0 0
        %655 = vmatprep.subr.bf16.mxu0 0
        %656 = vmatpush1.bf16.msra.mxu0 0
        %657 = vmatprep.subr.bf16.mxu0 0
        %658 = vmatpush1.bf16.msra.mxu0 0
        %659 = vmatprep.subr.bf16.mxu0 0
        %660 = vmatpush1.bf16.msra.mxu0 0
        %661 = vmatprep.subr.bf16.mxu0 0
        %662 = vmatpush1.bf16.msra.mxu0 0
        %663 = vmatprep.subr.bf16.mxu0 0
        %664 = vmatpush1.bf16.msra.mxu0 0
        %665 = vmatprep.subr.bf16.mxu0 0
        %666 = vmatpush1.bf16.msra.mxu0 0
        %667 = vmatprep.mubr.bf16.mxu0 0
        %668 = vmatmul.mubr.bf16.gmra.mrb[0].mxu0 %v633
        %v669 = vpop.f32.mrb[0].mxu0
        %v670 = vadd.f32 %v617, %v669
        %v671 = vpop.f32.mrb[0].mxu0
        %v672 = vpop.f32.mrb[0].mxu0
        %v673 = vpop.f32.mrb[0].mxu0
        %674 = vdwg.mxu0
        %v675 = vpack.c.bf16 %v670, %v670
        %v676 = vld [vmem:[#allocation2] sm:$0xf]
        %v677 = vld [vmem:[#allocation3] sm:$0xf]
        %v678 = vld [vmem:[%s8] sm:$0xf]
        %v679 = vld [vmem:[%s8 + $0x4] sm:$0xf]
        %vm680 = vcmask 130048
        %v682 = vsel %vm680, %v675, 0
        %v685 = vsel %vm680, %v676, 0
        %687 = vmatprep.subr.bf16.mxu0 0
        %688 = vmatpush1.bf16.xpose.msra.mxu0 %v685
        %689 = vmatprep.subr.bf16.mxu0 0
        %690 = vmatpush1.bf16.xpose.msra.mxu0 0
        %691 = vmatprep.subr.bf16.mxu0 0
        %692 = vmatpush1.bf16.xpose.msra.mxu0 0
        %693 = vmatprep.subr.bf16.mxu0 0
        %694 = vmatpush1.bf16.xpose.msra.mxu0 0
        %695 = vmatprep.subr.bf16.mxu0 0
        %696 = vmatpush1.bf16.xpose.msra.mxu0 0
        %697 = vmatprep.subr.bf16.mxu0 0
        %698 = vmatpush1.bf16.xpose.msra.mxu0 0
        %699 = vmatprep.subr.bf16.mxu0 0
        %700 = vmatpush1.bf16.xpose.msra.mxu0 0
        %701 = vmatprep.subr.bf16.mxu0 0
        %702 = vmatpush1.bf16.xpose.msra.mxu0 0
        %703 = vmatprep.subr.bf16.mxu0 0
        %704 = vmatpush1.bf16.xpose.msra.mxu0 0
        %705 = vmatprep.subr.bf16.mxu0 0
        %706 = vmatpush1.bf16.xpose.msra.mxu0 0
        %707 = vmatprep.subr.bf16.mxu0 0
        %708 = vmatpush1.bf16.xpose.msra.mxu0 0
        %709 = vmatprep.subr.bf16.mxu0 0
        %710 = vmatpush1.bf16.xpose.msra.mxu0 0
        %711 = vmatprep.subr.bf16.mxu0 0
        %712 = vmatpush1.bf16.xpose.msra.mxu0 0
        %713 = vmatprep.subr.bf16.mxu0 0
        %714 = vmatpush1.bf16.xpose.msra.mxu0 0
        %715 = vmatprep.subr.bf16.mxu0 0
        %716 = vmatpush1.bf16.xpose.msra.mxu0 0
        %717 = vmatprep.subr.bf16.mxu0 0
        %718 = vmatpush1.bf16.xpose.msra.mxu0 0
        %719 = vmatprep.mubr.bf16.mxu0 0
        %720 = vmatmul.mubr.bf16.gmra.mrb[0].mxu0 %v682
        %v721 = vpop.f32.mrb[0].mxu0
        %v722 = vadd.f32 0.0, %v721
        %v723 = vpop.f32.mrb[0].mxu0
        %v724 = vpop.f32.mrb[0].mxu0
        %v725 = vpop.f32.mrb[0].mxu0
        %726 = vdwg.mxu0
        %vm727 = vcmask 64512
        %v728 = vsel %vm727, %v722, -inf
        %729 = vmax.xlane.f32.xlu0 %v728
        %v730 = vpop.xlane.xlu0 %729
        %v731 = vsub.f32 %v722, %v730
        %v732 = vmul.f32 %v731, 1.442695
        %v733 = vpow.pop %v732
        %v734 = vsel %vm727, %v733, 0.0
        %735 = vadd.xlane.f32.xlu0 %v734
        %v736 = vpop.xlane.xlu0 %735
        %v737 = vrcp.pop %v736
        %v738 = vmul.f32 %v733, %v737
        %v739 = vpack.c.bf16 %v738, %v738
        %v741 = vsel %vm727, %v739, 0
        %vm743 = vcmask 1043456
        %v745 = vsel %vm743, %v677, 0
        %747 = vmatprep.subr.bf16.mxu0 0
        %748 = vmatpush1.bf16.msra.mxu0 %v745
        %749 = vmatprep.subr.bf16.mxu0 0
        %750 = vmatpush1.bf16.msra.mxu0 0
        %751 = vmatprep.subr.bf16.mxu0 0
        %752 = vmatpush1.bf16.msra.mxu0 0
        %753 = vmatprep.subr.bf16.mxu0 0
        %754 = vmatpush1.bf16.msra.mxu0 0
        %755 = vmatprep.subr.bf16.mxu0 0
        %756 = vmatpush1.bf16.msra.mxu0 0
        %757 = vmatprep.subr.bf16.mxu0 0
        %758 = vmatpush1.bf16.msra.mxu0 0
        %759 = vmatprep.subr.bf16.mxu0 0
        %760 = vmatpush1.bf16.msra.mxu0 0
        %761 = vmatprep.subr.bf16.mxu0 0
        %762 = vmatpush1.bf16.msra.mxu0 0
        %763 = vmatprep.subr.bf16.mxu0 0
        %764 = vmatpush1.bf16.msra.mxu0 0
        %765 = vmatprep.subr.bf16.mxu0 0
        %766 = vmatpush1.bf16.msra.mxu0 0
        %767 = vmatprep.subr.bf16.mxu0 0
        %768 = vmatpush1.bf16.msra.mxu0 0
        %769 = vmatprep.subr.bf16.mxu0 0
        %770 = vmatpush1.bf16.msra.mxu0 0
        %771 = vmatprep.subr.bf16.mxu0 0
        %772 = vmatpush1.bf16.msra.mxu0 0
        %773 = vmatprep.subr.bf16.mxu0 0
        %774 = vmatpush1.bf16.msra.mxu0 0
        %775 = vmatprep.subr.bf16.mxu0 0
        %776 = vmatpush1.bf16.msra.mxu0 0
        %777 = vmatprep.subr.bf16.mxu0 0
        %778 = vmatpush1.bf16.msra.mxu0 0
        %779 = vmatprep.mubr.bf16.mxu0 0
        %780 = vmatmul.mubr.bf16.gmra.mrb[0].mxu0 %v741
        %v781 = vpop.f32.mrb[0].mxu0
        %v782 = vadd.f32 0.0, %v781
        %v783 = vpop.f32.mrb[0].mxu0
        %v784 = vpop.f32.mrb[0].mxu0
        %v785 = vpop.f32.mrb[0].mxu0
        %786 = vdwg.mxu0
        %v787 = vpack.c.bf16 %v782, %v782
        %789 = vrot.lane.b32.xlu0 %v675, 112
        %v790 = vpop.permute.xlu0 %789
        %v792 = vunpack.c.l.b16 %v676
        %v793 = vpack.c.b16 %v792, %v792
        %794 = vrot.lane.b32.xlu0 %v793, 112
        %v795 = vpop.permute.xlu0 %794
        %v797 = vsel %vm680, %v790, 0
        %v800 = vsel %vm680, %v795, 0
        %802 = vmatprep.subr.bf16.mxu0 0
        %803 = vmatpush1.bf16.xpose.msra.mxu0 %v800
        %804 = vmatprep.subr.bf16.mxu0 0
        %805 = vmatpush1.bf16.xpose.msra.mxu0 0
        %806 = vmatprep.subr.bf16.mxu0 0
        %807 = vmatpush1.bf16.xpose.msra.mxu0 0
        %808 = vmatprep.subr.bf16.mxu0 0
        %809 = vmatpush1.bf16.xpose.msra.mxu0 0
        %810 = vmatprep.subr.bf16.mxu0 0
        %811 = vmatpush1.bf16.xpose.msra.mxu0 0
        %812 = vmatprep.subr.bf16.mxu0 0
        %813 = vmatpush1.bf16.xpose.msra.mxu0 0
        %814 = vmatprep.subr.bf16.mxu0 0
        %815 = vmatpush1.bf16.xpose.msra.mxu0 0
        %816 = vmatprep.subr.bf16.mxu0 0
        %817 = vmatpush1.bf16.xpose.msra.mxu0 0
        %818 = vmatprep.subr.bf16.mxu0 0
        %819 = vmatpush1.bf16.xpose.msra.mxu0 0
        %820 = vmatprep.subr.bf16.mxu0 0
        %821 = vmatpush1.bf16.xpose.msra.mxu0 0
        %822 = vmatprep.subr.bf16.mxu0 0
        %823 = vmatpush1.bf16.xpose.msra.mxu0 0
        %824 = vmatprep.subr.bf16.mxu0 0
        %825 = vmatpush1.bf16.xpose.msra.mxu0 0
        %826 = vmatprep.subr.bf16.mxu0 0
        %827 = vmatpush1.bf16.xpose.msra.mxu0 0
        %828 = vmatprep.subr.bf16.mxu0 0
        %829 = vmatpush1.bf16.xpose.msra.mxu0 0
        %830 = vmatprep.subr.bf16.mxu0 0
        %831 = vmatpush1.bf16.xpose.msra.mxu0 0
        %832 = vmatprep.subr.bf16.mxu0 0
        %833 = vmatpush1.bf16.xpose.msra.mxu0 0
        %834 = vmatprep.mubr.bf16.mxu0 0
        %835 = vmatmul.mubr.bf16.gmra.mrb[0].mxu0 %v797
        %v836 = vpop.f32.mrb[0].mxu0
        %v837 = vadd.f32 0.0, %v836
        %v838 = vpop.f32.mrb[0].mxu0
        %v839 = vpop.f32.mrb[0].mxu0
        %v840 = vpop.f32.mrb[0].mxu0
        %841 = vdwg.mxu0
        %v842 = vsel %vm727, %v837, -inf
        %843 = vmax.xlane.f32.xlu0 %v842
        %v844 = vpop.xlane.xlu0 %843
        %v845 = vsub.f32 %v837, %v844
        %v846 = vmul.f32 %v845, 1.442695
        %v847 = vpow.pop %v846
        %v848 = vsel %vm727, %v847, 0.0
        %849 = vadd.xlane.f32.xlu0 %v848
        %v850 = vpop.xlane.xlu0 %849
        %v851 = vrcp.pop %v850
        %v852 = vmul.f32 %v847, %v851
        %v853 = vpack.c.bf16 %v852, %v852
        %v855 = vunpack.c.l.b16 %v677
        %v856 = vpack.c.b16 %v855, %v855
        %857 = vrot.lane.b32.xlu0 %v856, 112
        %v858 = vpop.permute.xlu0 %857
        %v860 = vsel %vm727, %v853, 0
        %v863 = vsel %vm743, %v858, 0
        %865 = vmatprep.subr.bf16.mxu0 0
        %866 = vmatpush1.bf16.msra.mxu0 %v863
        %867 = vmatprep.subr.bf16.mxu0 0
        %868 = vmatpush1.bf16.msra.mxu0 0
        %869 = vmatprep.subr.bf16.mxu0 0
        %870 = vmatpush1.bf16.msra.mxu0 0
        %871 = vmatprep.subr.bf16.mxu0 0
        %872 = vmatpush1.bf16.msra.mxu0 0
        %873 = vmatprep.subr.bf16.mxu0 0
        %874 = vmatpush1.bf16.msra.mxu0 0
        %875 = vmatprep.subr.bf16.mxu0 0
        %876 = vmatpush1.bf16.msra.mxu0 0
        %877 = vmatprep.subr.bf16.mxu0 0
        %878 = vmatpush1.bf16.msra.mxu0 0
        %879 = vmatprep.subr.bf16.mxu0 0
        %880 = vmatpush1.bf16.msra.mxu0 0
        %881 = vmatprep.subr.bf16.mxu0 0
        %882 = vmatpush1.bf16.msra.mxu0 0
        %883 = vmatprep.subr.bf16.mxu0 0
        %884 = vmatpush1.bf16.msra.mxu0 0
        %885 = vmatprep.subr.bf16.mxu0 0
        %886 = vmatpush1.bf16.msra.mxu0 0
        %887 = vmatprep.subr.bf16.mxu0 0
        %888 = vmatpush1.bf16.msra.mxu0 0
        %889 = vmatprep.subr.bf16.mxu0 0
        %890 = vmatpush1.bf16.msra.mxu0 0
        %891 = vmatprep.subr.bf16.mxu0 0
        %892 = vmatpush1.bf16.msra.mxu0 0
        %893 = vmatprep.subr.bf16.mxu0 0
        %894 = vmatpush1.bf16.msra.mxu0 0
        %895 = vmatprep.subr.bf16.mxu0 0
        %896 = vmatpush1.bf16.msra.mxu0 0
        %897 = vmatprep.mubr.bf16.mxu0 0
        %898 = vmatmul.mubr.bf16.gmra.mrb[0].mxu0 %v860
        %v899 = vpop.f32.mrb[0].mxu0
        %v900 = vadd.f32 0.0, %v899
        %v901 = vpop.f32.mrb[0].mxu0
        %v902 = vpop.f32.mrb[0].mxu0
        %v903 = vpop.f32.mrb[0].mxu0
        %904 = vdwg.mxu0
        %v905 = vpack.c.bf16 %v900, %v900
        %v908 = vunpack.c.l.b16 %v678
        %v909 = vunpack.c.l.b16 %v679
        %v910 = vpack.c.b16 %v909, %v908
        %911 = vrot.lane.b32.xlu0 %v910, 112
        %v912 = vpop.permute.xlu0 %911
        %v914 = vsel %vm680, %v912, 0
        %v917 = vsel %vm680, %v905, 0
        %919 = vmatprep.subr.bf16.mxu0 0
        %920 = vmatpush1.bf16.xpose.msra.mxu0 %v917
        %921 = vmatprep.subr.bf16.mxu0 0
        %922 = vmatpush1.bf16.xpose.msra.mxu0 0
        %923 = vmatprep.subr.bf16.mxu0 0
        %924 = vmatpush1.bf16.xpose.msra.mxu0 0
        %925 = vmatprep.subr.bf16.mxu0 0
        %926 = vmatpush1.bf16.xpose.msra.mxu0 0
        %927 = vmatprep.subr.bf16.mxu0 0
        %928 = vmatpush1.bf16.xpose.msra.mxu0 0
        %929 = vmatprep.subr.bf16.mxu0 0
        %930 = vmatpush1.bf16.xpose.msra.mxu0 0
        %931 = vmatprep.subr.bf16.mxu0 0
        %932 = vmatpush1.bf16.xpose.msra.mxu0 0
        %933 = vmatprep.subr.bf16.mxu0 0
        %934 = vmatpush1.bf16.xpose.msra.mxu0 0
        %935 = vmatprep.subr.bf16.mxu0 0
        %936 = vmatpush1.bf16.xpose.msra.mxu0 0
        %937 = vmatprep.subr.bf16.mxu0 0
        %938 = vmatpush1.bf16.xpose.msra.mxu0 0
        %939 = vmatprep.subr.bf16.mxu0 0
        %940 = vmatpush1.bf16.xpose.msra.mxu0 0
        %941 = vmatprep.subr.bf16.mxu0 0
        %942 = vmatpush1.bf16.xpose.msra.mxu0 0
        %943 = vmatprep.subr.bf16.mxu0 0
        %944 = vmatpush1.bf16.xpose.msra.mxu0 0
        %945 = vmatprep.subr.bf16.mxu0 0
        %946 = vmatpush1.bf16.xpose.msra.mxu0 0
        %947 = vmatprep.subr.bf16.mxu0 0
        %948 = vmatpush1.bf16.xpose.msra.mxu0 0
        %949 = vmatprep.subr.bf16.mxu0 0
        %950 = vmatpush1.bf16.xpose.msra.mxu0 0
        %951 = vmatprep.mubr.bf16.mxu0 0
        %952 = vmatmul.mubr.bf16.gmra.mrb[0].mxu0 %v914
        %v953 = vpop.f32.mrb[0].mxu0
        %v954 = vadd.f32 0.0, %v953
        %v955 = vpop.f32.mrb[0].mxu0
        %v956 = vpop.f32.mrb[0].mxu0
        %v957 = vadd.f32 0.0, %v956
        %v958 = vpop.f32.mrb[0].mxu0
        %959 = vdwg.mxu0
        %v961 = vsel %vm680, %v910, 0
        %v964 = vsel %vm680, %v787, 0
        %966 = vmatprep.subr.bf16.mxu0 0
        %967 = vmatpush1.bf16.xpose.msra.mxu0 %v964
        %968 = vmatprep.subr.bf16.mxu0 0
        %969 = vmatpush1.bf16.xpose.msra.mxu0 0
        %970 = vmatprep.subr.bf16.mxu0 0
        %971 = vmatpush1.bf16.xpose.msra.mxu0 0
        %972 = vmatprep.subr.bf16.mxu0 0
        %973 = vmatpush1.bf16.xpose.msra.mxu0 0
        %974 = vmatprep.subr.bf16.mxu0 0
        %975 = vmatpush1.bf16.xpose.msra.mxu0 0
        %976 = vmatprep.subr.bf16.mxu0 0
        %977 = vmatpush1.bf16.xpose.msra.mxu0 0
        %978 = vmatprep.subr.bf16.mxu0 0
        %979 = vmatpush1.bf16.xpose.msra.mxu0 0
        %980 = vmatprep.subr.bf16.mxu0 0
        %981 = vmatpush1.bf16.xpose.msra.mxu0 0
        %982 = vmatprep.subr.bf16.mxu0 0
        %983 = vmatpush1.bf16.xpose.msra.mxu0 0
        %984 = vmatprep.subr.bf16.mxu0 0
        %985 = vmatpush1.bf16.xpose.msra.mxu0 0
        %986 = vmatprep.subr.bf16.mxu0 0
        %987 = vmatpush1.bf16.xpose.msra.mxu0 0
        %988 = vmatprep.subr.bf16.mxu0 0
        %989 = vmatpush1.bf16.xpose.msra.mxu0 0
        %990 = vmatprep.subr.bf16.mxu0 0
        %991 = vmatpush1.bf16.xpose.msra.mxu0 0
        %992 = vmatprep.subr.bf16.mxu0 0
        %993 = vmatpush1.bf16.xpose.msra.mxu0 0
        %994 = vmatprep.subr.bf16.mxu0 0
        %995 = vmatpush1.bf16.xpose.msra.mxu0 0
        %996 = vmatprep.subr.bf16.mxu0 0
        %997 = vmatpush1.bf16.xpose.msra.mxu0 0
        %998 = vmatprep.mubr.bf16.mxu0 0
        %999 = vmatmul.mubr.bf16.gmra.mrb[0].mxu0 %v961
        %v1000 = vpop.f32.mrb[0].mxu0
        %v1001 = vadd.f32 %v954, %v1000
        %v1002 = vpop.f32.mrb[0].mxu0
        %v1003 = vpop.f32.mrb[0].mxu0
        %v1004 = vadd.f32 %v957, %v1003
        %v1005 = vpop.f32.mrb[0].mxu0
        %1006 = vdwg.mxu0
        %1007 = vrot.lane.b32.xlu0 %v675, 96
        %v1008 = vpop.permute.xlu0 %1007
        %1009 = vrot.lane.b32.xlu0 %v793, 96
        %v1010 = vpop.permute.xlu0 %1009
        %v1012 = vsel %vm680, %v1008, 0
        %v1015 = vsel %vm680, %v1010, 0
        %1017 = vmatprep.subr.bf16.mxu0 0
        %1018 = vmatpush1.bf16.xpose.msra.mxu0 %v1015
        %1019 = vmatprep.subr.bf16.mxu0 0
        %1020 = vmatpush1.bf16.xpose.msra.mxu0 0
        %1021 = vmatprep.subr.bf16.mxu0 0
        %1022 = vmatpush1.bf16.xpose.msra.mxu0 0
        %1023 = vmatprep.subr.bf16.mxu0 0
        %1024 = vmatpush1.bf16.xpose.msra.mxu0 0
        %1025 = vmatprep.subr.bf16.mxu0 0
        %1026 = vmatpush1.bf16.xpose.msra.mxu0 0
        %1027 = vmatprep.subr.bf16.mxu0 0
        %1028 = vmatpush1.bf16.xpose.msra.mxu0 0
        %1029 = vmatprep.subr.bf16.mxu0 0
        %1030 = vmatpush1.bf16.xpose.msra.mxu0 0
        %1031 = vmatprep.subr.bf16.mxu0 0
        %1032 = vmatpush1.bf16.xpose.msra.mxu0 0
        %1033 = vmatprep.subr.bf16.mxu0 0
        %1034 = vmatpush1.bf16.xpose.msra.mxu0 0
        %1035 = vmatprep.subr.bf16.mxu0 0
        %1036 = vmatpush1.bf16.xpose.msra.mxu0 0
        %1037 = vmatprep.subr.bf16.mxu0 0
        %1038 = vmatpush1.bf16.xpose.msra.mxu0 0
        %1039 = vmatprep.subr.bf16.mxu0 0
        %1040 = vmatpush1.bf16.xpose.msra.mxu0 0
        %1041 = vmatprep.subr.bf16.mxu0 0
        %1042 = vmatpush1.bf16.xpose.msra.mxu0 0
        %1043 = vmatprep.subr.bf16.mxu0 0
        %1044 = vmatpush1.bf16.xpose.msra.mxu0 0
        %1045 = vmatprep.subr.bf16.mxu0 0
        %1046 = vmatpush1.bf16.xpose.msra.mxu0 0
        %1047 = vmatprep.subr.bf16.mxu0 0
        %1048 = vmatpush1.bf16.xpose.msra.mxu0 0
        %1049 = vmatprep.mubr.bf16.mxu0 0
        %1050 = vmatmul.mubr.bf16.gmra.mrb[0].mxu0 %v1012
        %v1051 = vpop.f32.mrb[0].mxu0
        %v1052 = vadd.f32 0.0, %v1051
        %v1053 = vpop.f32.mrb[0].mxu0
        %v1054 = vpop.f32.mrb[0].mxu0
        %v1055 = vpop.f32.mrb[0].mxu0
        %1056 = vdwg.mxu0
        %v1057 = vsel %vm727, %v1052, -inf
        %1058 = vmax.xlane.f32.xlu0 %v1057
        %v1059 = vpop.xlane.xlu0 %1058
        %v1060 = vsub.f32 %v1052, %v1059
        %v1061 = vmul.f32 %v1060, 1.442695
        %v1062 = vpow.pop %v1061
        %v1063 = vsel %vm727, %v1062, 0.0
        %1064 = vadd.xlane.f32.xlu0 %v1063
        %v1065 = vpop.xlane.xlu0 %1064
        %v1066 = vrcp.pop %v1065
        %v1067 = vmul.f32 %v1062, %v1066
        %v1068 = vpack.c.bf16 %v1067, %v1067
        %1069 = vrot.lane.b32.xlu0 %v856, 96
        %v1070 = vpop.permute.xlu0 %1069
        %v1072 = vsel %vm727, %v1068, 0
        %v1075 = vsel %vm743, %v1070, 0
        %1077 = vmatprep.subr.bf16.mxu0 0
        %1078 = vmatpush1.bf16.msra.mxu0 %v1075
        %1079 = vmatprep.subr.bf16.mxu0 0
        %1080 = vmatpush1.bf16.msra.mxu0 0
        %1081 = vmatprep.subr.bf16.mxu0 0
        %1082 = vmatpush1.bf16.msra.mxu0 0
        %1083 = vmatprep.subr.bf16.mxu0 0
        %1084 = vmatpush1.bf16.msra.mxu0 0
        %1085 = vmatprep.subr.bf16.mxu0 0
        %1086 = vmatpush1.bf16.msra.mxu0 0
        %1087 = vmatprep.subr.bf16.mxu0 0
        %1088 = vmatpush1.bf16.msra.mxu0 0
        %1089 = vmatprep.subr.bf16.mxu0 0
        %1090 = vmatpush1.bf16.msra.mxu0 0
        %1091 = vmatprep.subr.bf16.mxu0 0
        %1092 = vmatpush1.bf16.msra.mxu0 0
        %1093 = vmatprep.subr.bf16.mxu0 0
        %1094 = vmatpush1.bf16.msra.mxu0 0
        %1095 = vmatprep.subr.bf16.mxu0 0
        %1096 = vmatpush1.bf16.msra.mxu0 0
        %1097 = vmatprep.subr.bf16.mxu0 0
        %1098 = vmatpush1.bf16.msra.mxu0 0
        %1099 = vmatprep.subr.bf16.mxu0 0
        %1100 = vmatpush1.bf16.msra.mxu0 0
        %1101 = vmatprep.subr.bf16.mxu0 0
        %1102 = vmatpush1.bf16.msra.mxu0 0
        %1103 = vmatprep.subr.bf16.mxu0 0
        %1104 = vmatpush1.bf16.msra.mxu0 0
        %1105 = vmatprep.subr.bf16.mxu0 0
        %1106 = vmatpush1.bf16.msra.mxu0 0
        %1107 = vmatprep.subr.bf16.mxu0 0
        %1108 = vmatpush1.bf16.msra.mxu0 0
        %1109 = vmatprep.mubr.bf16.mxu0 0
        %1110 = vmatmul.mubr.bf16.gmra.mrb[0].mxu0 %v1072
        %v1111 = vpop.f32.mrb[0].mxu0
        %v1112 = vadd.f32 0.0, %v1111
        %v1113 = vpop.f32.mrb[0].mxu0
        %v1114 = vpop.f32.mrb[0].mxu0
        %v1115 = vpop.f32.mrb[0].mxu0
        %1116 = vdwg.mxu0
        %v1117 = vpack.c.bf16 %v1112, %v1112
        %1118 = vrot.lane.b32.xlu0 %v910, 96
        %v1119 = vpop.permute.xlu0 %1118
        %v1121 = vsel %vm680, %v1119, 0
        %v1124 = vsel %vm680, %v1117, 0
        %1126 = vmatprep.subr.bf16.mxu0 0
        %1127 = vmatpush1.bf16.xpose.msra.mxu0 %v1124
        %1128 = vmatprep.subr.bf16.mxu0 0
        %1129 = vmatpush1.bf16.xpose.msra.mxu0 0
        %1130 = vmatprep.subr.bf16.mxu0 0
        %1131 = vmatpush1.bf16.xpose.msra.mxu0 0
        %1132 = vmatprep.subr.bf16.mxu0 0
        %1133 = vmatpush1.bf16.xpose.msra.mxu0 0
        %1134 = vmatprep.subr.bf16.mxu0 0
        %1135 = vmatpush1.bf16.xpose.msra.mxu0 0
        %1136 = vmatprep.subr.bf16.mxu0 0
        %1137 = vmatpush1.bf16.xpose.msra.mxu0 0
        %1138 = vmatprep.subr.bf16.mxu0 0
        %1139 = vmatpush1.bf16.xpose.msra.mxu0 0
        %1140 = vmatprep.subr.bf16.mxu0 0
        %1141 = vmatpush1.bf16.xpose.msra.mxu0 0
        %1142 = vmatprep.subr.bf16.mxu0 0
        %1143 = vmatpush1.bf16.xpose.msra.mxu0 0
        %1144 = vmatprep.subr.bf16.mxu0 0
        %1145 = vmatpush1.bf16.xpose.msra.mxu0 0
        %1146 = vmatprep.subr.bf16.mxu0 0
        %1147 = vmatpush1.bf16.xpose.msra.mxu0 0
        %1148 = vmatprep.subr.bf16.mxu0 0
        %1149 = vmatpush1.bf16.xpose.msra.mxu0 0
        %1150 = vmatprep.subr.bf16.mxu0 0
        %1151 = vmatpush1.bf16.xpose.msra.mxu0 0
        %1152 = vmatprep.subr.bf16.mxu0 0
        %1153 = vmatpush1.bf16.xpose.msra.mxu0 0
        %1154 = vmatprep.subr.bf16.mxu0 0
        %1155 = vmatpush1.bf16.xpose.msra.mxu0 0
        %1156 = vmatprep.subr.bf16.mxu0 0
        %1157 = vmatpush1.bf16.xpose.msra.mxu0 0
        %1158 = vmatprep.mubr.bf16.mxu0 0
        %1159 = vmatmul.mubr.bf16.gmra.mrb[0].mxu0 %v1121
        %v1160 = vpop.f32.mrb[0].mxu0
        %v1161 = vadd.f32 0.0, %v1160
        %v1162 = vpop.f32.mrb[0].mxu0
        %v1163 = vpop.f32.mrb[0].mxu0
        %v1164 = vadd.f32 0.0, %v1163
        %v1165 = vpop.f32.mrb[0].mxu0
        %1166 = vdwg.mxu0
        %v1167 = vadd.f32 %v1001, %v1161
        %v1168 = vadd.f32 %v1004, %v1164
        %1169 = vrot.lane.b32.xlu0 %v675, 80
        %v1170 = vpop.permute.xlu0 %1169
        %1171 = vrot.lane.b32.xlu0 %v793, 80
        %v1172 = vpop.permute.xlu0 %1171
        %v1174 = vsel %vm680, %v1170, 0
        %v1177 = vsel %vm680, %v1172, 0
        %1179 = vmatprep.subr.bf16.mxu0 0
        %1180 = vmatpush1.bf16.xpose.msra.mxu0 %v1177
        %1181 = vmatprep.subr.bf16.mxu0 0
        %1182 = vmatpush1.bf16.xpose.msra.mxu0 0
        %1183 = vmatprep.subr.bf16.mxu0 0
        %1184 = vmatpush1.bf16.xpose.msra.mxu0 0
        %1185 = vmatprep.subr.bf16.mxu0 0
        %1186 = vmatpush1.bf16.xpose.msra.mxu0 0
        %1187 = vmatprep.subr.bf16.mxu0 0
        %1188 = vmatpush1.bf16.xpose.msra.mxu0 0
        %1189 = vmatprep.subr.bf16.mxu0 0
        %1190 = vmatpush1.bf16.xpose.msra.mxu0 0
        %1191 = vmatprep.subr.bf16.mxu0 0
        %1192 = vmatpush1.bf16.xpose.msra.mxu0 0
        %1193 = vmatprep.subr.bf16.mxu0 0
        %1194 = vmatpush1.bf16.xpose.msra.mxu0 0
        %1195 = vmatprep.subr.bf16.mxu0 0
        %1196 = vmatpush1.bf16.xpose.msra.mxu0 0
        %1197 = vmatprep.subr.bf16.mxu0 0
        %1198 = vmatpush1.bf16.xpose.msra.mxu0 0
        %1199 = vmatprep.subr.bf16.mxu0 0
        %1200 = vmatpush1.bf16.xpose.msra.mxu0 0
        %1201 = vmatprep.subr.bf16.mxu0 0
        %1202 = vmatpush1.bf16.xpose.msra.mxu0 0
        %1203 = vmatprep.subr.bf16.mxu0 0
        %1204 = vmatpush1.bf16.xpose.msra.mxu0 0
        %1205 = vmatprep.subr.bf16.mxu0 0
        %1206 = vmatpush1.bf16.xpose.msra.mxu0 0
        %1207 = vmatprep.subr.bf16.mxu0 0
        %1208 = vmatpush1.bf16.xpose.msra.mxu0 0
        %1209 = vmatprep.subr.bf16.mxu0 0
        %1210 = vmatpush1.bf16.xpose.msra.mxu0 0
        %1211 = vmatprep.mubr.bf16.mxu0 0
        %1212 = vmatmul.mubr.bf16.gmra.mrb[0].mxu0 %v1174
        %v1213 = vpop.f32.mrb[0].mxu0
        %v1214 = vadd.f32 0.0, %v1213
        %v1215 = vpop.f32.mrb[0].mxu0
        %v1216 = vpop.f32.mrb[0].mxu0
        %v1217 = vpop.f32.mrb[0].mxu0
        %1218 = vdwg.mxu0
        %v1219 = vsel %vm727, %v1214, -inf
        %1220 = vmax.xlane.f32.xlu0 %v1219
        %v1221 = vpop.xlane.xlu0 %1220
        %v1222 = vsub.f32 %v1214, %v1221
        %v1223 = vmul.f32 %v1222, 1.442695
        %v1224 = vpow.pop %v1223
        %v1225 = vsel %vm727, %v1224, 0.0
        %1226 = vadd.xlane.f32.xlu0 %v1225
        %v1227 = vpop.xlane.xlu0 %1226
        %v1228 = vrcp.pop %v1227
        %v1229 = vmul.f32 %v1224, %v1228
        %v1230 = vpack.c.bf16 %v1229, %v1229
        %1231 = vrot.lane.b32.xlu0 %v856, 80
        %v1232 = vpop.permute.xlu0 %1231
        %v1234 = vsel %vm727, %v1230, 0
        %v1237 = vsel %vm743, %v1232, 0
        %1239 = vmatprep.subr.bf16.mxu0 0
        %1240 = vmatpush1.bf16.msra.mxu0 %v1237
        %1241 = vmatprep.subr.bf16.mxu0 0
        %1242 = vmatpush1.bf16.msra.mxu0 0
        %1243 = vmatprep.subr.bf16.mxu0 0
        %1244 = vmatpush1.bf16.msra.mxu0 0
        %1245 = vmatprep.subr.bf16.mxu0 0
        %1246 = vmatpush1.bf16.msra.mxu0 0
        %1247 = vmatprep.subr.bf16.mxu0 0
        %1248 = vmatpush1.bf16.msra.mxu0 0
        %1249 = vmatprep.subr.bf16.mxu0 0
        %1250 = vmatpush1.bf16.msra.mxu0 0
        %1251 = vmatprep.subr.bf16.mxu0 0
        %1252 = vmatpush1.bf16.msra.mxu0 0
        %1253 = vmatprep.subr.bf16.mxu0 0
        %1254 = vmatpush1.bf16.msra.mxu0 0
        %1255 = vmatprep.subr.bf16.mxu0 0
        %1256 = vmatpush1.bf16.msra.mxu0 0
        %1257 = vmatprep.subr.bf16.mxu0 0
        %1258 = vmatpush1.bf16.msra.mxu0 0
        %1259 = vmatprep.subr.bf16.mxu0 0
        %1260 = vmatpush1.bf16.msra.mxu0 0
        %1261 = vmatprep.subr.bf16.mxu0 0
        %1262 = vmatpush1.bf16.msra.mxu0 0
        %1263 = vmatprep.subr.bf16.mxu0 0
        %1264 = vmatpush1.bf16.msra.mxu0 0
        %1265 = vmatprep.subr.bf16.mxu0 0
        %1266 = vmatpush1.bf16.msra.mxu0 0
        %1267 = vmatprep.subr.bf16.mxu0 0
        %1268 = vmatpush1.bf16.msra.mxu0 0
        %1269 = vmatprep.subr.bf16.mxu0 0
        %1270 = vmatpush1.bf16.msra.mxu0 0
        %1271 = vmatprep.mubr.bf16.mxu0 0
        %1272 = vmatmul.mubr.bf16.gmra.mrb[0].mxu0 %v1234
        %v1273 = vpop.f32.mrb[0].mxu0
        %v1274 = vadd.f32 0.0, %v1273
        %v1275 = vpop.f32.mrb[0].mxu0
        %v1276 = vpop.f32.mrb[0].mxu0
        %v1277 = vpop.f32.mrb[0].mxu0
        %1278 = vdwg.mxu0
        %v1279 = vpack.c.bf16 %v1274, %v1274
        %1280 = vrot.lane.b32.xlu0 %v910, 80
        %v1281 = vpop.permute.xlu0 %1280
        %v1283 = vsel %vm680, %v1281, 0
        %v1286 = vsel %vm680, %v1279, 0
        %1288 = vmatprep.subr.bf16.mxu0 0
        %1289 = vmatpush1.bf16.xpose.msra.mxu0 %v1286
        %1290 = vmatprep.subr.bf16.mxu0 0
        %1291 = vmatpush1.bf16.xpose.msra.mxu0 0
        %1292 = vmatprep.subr.bf16.mxu0 0
        %1293 = vmatpush1.bf16.xpose.msra.mxu0 0
        %1294 = vmatprep.subr.bf16.mxu0 0
        %1295 = vmatpush1.bf16.xpose.msra.mxu0 0
        %1296 = vmatprep.subr.bf16.mxu0 0
        %1297 = vmatpush1.bf16.xpose.msra.mxu0 0
        %1298 = vmatprep.subr.bf16.mxu0 0
        %1299 = vmatpush1.bf16.xpose.msra.mxu0 0
        %1300 = vmatprep.subr.bf16.mxu0 0
        %1301 = vmatpush1.bf16.xpose.msra.mxu0 0
        %1302 = vmatprep.subr.bf16.mxu0 0
        %1303 = vmatpush1.bf16.xpose.msra.mxu0 0
        %1304 = vmatprep.subr.bf16.mxu0 0
        %1305 = vmatpush1.bf16.xpose.msra.mxu0 0
        %1306 = vmatprep.subr.bf16.mxu0 0
        %1307 = vmatpush1.bf16.xpose.msra.mxu0 0
        %1308 = vmatprep.subr.bf16.mxu0 0
        %1309 = vmatpush1.bf16.xpose.msra.mxu0 0
        %1310 = vmatprep.subr.bf16.mxu0 0
        %1311 = vmatpush1.bf16.xpose.msra.mxu0 0
        %1312 = vmatprep.subr.bf16.mxu0 0
        %1313 = vmatpush1.bf16.xpose.msra.mxu0 0
        %1314 = vmatprep.subr.bf16.mxu0 0
        %1315 = vmatpush1.bf16.xpose.msra.mxu0 0
        %1316 = vmatprep.subr.bf16.mxu0 0
        %1317 = vmatpush1.bf16.xpose.msra.mxu0 0
        %1318 = vmatprep.subr.bf16.mxu0 0
        %1319 = vmatpush1.bf16.xpose.msra.mxu0 0
        %1320 = vmatprep.mubr.bf16.mxu0 0
        %1321 = vmatmul.mubr.bf16.gmra.mrb[0].mxu0 %v1283
        %v1322 = vpop.f32.mrb[0].mxu0
        %v1323 = vadd.f32 0.0, %v1322
        %v1324 = vpop.f32.mrb[0].mxu0
        %v1325 = vpop.f32.mrb[0].mxu0
        %v1326 = vadd.f32 0.0, %v1325
        %v1327 = vpop.f32.mrb[0].mxu0
        %1328 = vdwg.mxu0
        %v1329 = vadd.f32 %v1167, %v1323
        %v1330 = vadd.f32 %v1168, %v1326
        %v1331 = vld [vmem:[%s9] sm:$0xff]
        %v1332 = vld [vmem:[%s9 + $0x8] sm:$0xff]
        %1334 = vset.pattern.permute.xlu0 0
        %1335 = vperm.xlu0 %1334, %v1331
        %v1336 = vpop.permute.xlu0 %1335
        %1339 = vset.pattern.permute.xlu0 0
        %1340 = vperm.xlu0 %1339, %v1332
        %v1341 = vpop.permute.xlu0 %1340
        %v1343 = vadd.f32 %v1329, %v1336
        %v1344 = vadd.f32 %v1330, %v1341
        %1345 = vst.msk [vmem:[%s465] sm:$0xff] %vm727, %v1343
        %1346 = vst.msk [vmem:[%s465 + $0x8] sm:$0xff] %vm727, %v1344
        %p1347 = scmp.lt.s32.totalorder %s32, 1
        %s1348 = scalar_select %p1347, %s32, 1
        %p1349 = scmp.lt.s32.totalorder %s33, 0
        %s1350 = scalar_select %p1349, %s33, 0
        %s1351 = smul.addr %s1350, 2
        %s1352 = smul.addr %s1348, 2
        %s1353 = sadd.s32 %s1351, %s1352
        %s1354 = smul.addr %s1353, 8
        %s1355 = scalar_lea.vmem %s10, %s1354
        // Predicated region
        $region81: #{tpu_custom_call.1} parent=59 // pred_check
          %p1356 = pneg %p282
        $region82: #{tpu_custom_call.1} parent=59 // pred_check_branch
          %1358 = sbr.rel (%p1356) target = $region84
        $region83: #{tpu_custom_call.1} parent=59 // pred_region
          _
        $region84: #{tpu_custom_call.1} parent=59 // pred_fallthru
          _
      $region60: #{tpu_custom_call.1} parent=5 // pred_fallthru
        _
      %p1359 = scmp.le.s32.totalorder 2, %s23
      // Predicated region
      $region85: #{tpu_custom_call.1} parent=5 // pred_check
        %p1360 = pneg %p1359
      $region86: #{tpu_custom_call.1} parent=5 // pred_check_branch
        %1362 = sbr.rel (%p1360) target = $region88
      $region87: #{tpu_custom_call.1} parent=5 // pred_region
        %s1363 = ssub.s32 %s23, 2
        // Predicated region
        $region89: #{tpu_custom_call.1} parent=87 // pred_check
          %p1364 = pneg %p288
        $region90: #{tpu_custom_call.1} parent=87 // pred_check_branch
          %1366 = sbr.rel (%p1364) target = $region92
        $region91: #{tpu_custom_call.1} parent=87 // pred_region
          %p1367 = scmp.lt.s32.totalorder %s34, 1
          %s1368 = scalar_select %p1367, %s34, 1
          %p1369 = scmp.lt.s32.totalorder %s35, 0
          %s1370 = scalar_select %p1369, %s35, 0
          %s1371 = smul.addr %s1370, 2
          %s1372 = smul.addr %s1368, 2
          %s1373 = sadd.s32 %s1371, %s1372
          %s1374 = smul.addr %s1373, 8
          %s1375 = scalar_lea.vmem %s10, %s1374
        $region92: #{tpu_custom_call.1} parent=87 // pred_fallthru
          _
      $region88: #{tpu_custom_call.1} parent=5 // pred_fallthru
        _
    $region6: #{tpu_custom_call.1} parent=1 // loop_footer
      %s27 = sadd.s32 1, %s23
    $region7: #{tpu_custom_call.1} parent=1 // loop_footer_branch
      %22 = sbr.rel target = $region3
    $region8: #{tpu_custom_call.1} parent=1 // loop_exit
      _
    %1376 = vsyncpa [#allocation5], 1
    %s1377 = scalar_lea.sflag [#allocation5], 1
    %1378 = vsyncpa %s1377, 1
    %1379 = vsyncpa [#allocation7], 1
    %s1380 = scalar_lea.sflag [#allocation7], 1
    %1381 = vsyncpa %s1380, 1
    %1382 = vsyncpa [#allocation10], 1

</llo_original>
